<compile_context>
chip_gen: v5e
topology: v5e:2x2
jax: 0.10.0
libtpu: 0.0.40
codegen_flags: <defaults>
</compile_context>

<pallas_src>
import jax
import jax.numpy as jnp
from jax.experimental import pallas as pl
from jax.experimental.pallas import tpu as pltpu

_INV_SQRT2 = 0.7071067811865476


def _gelu_kernel(x_ref, o_ref):
    x = x_ref[...]
    if x.dtype != jnp.float32:
        # Keep the erf argument in f32 so low-precision inputs still match
        # torch.nn.GELU(approximate='none') numerics closely.
        x = x.astype(jnp.float32)
    y = 0.5 * x * (1.0 + jax.lax.erf(x * _INV_SQRT2))
    o_ref[...] = y.astype(o_ref.dtype)


def _num_tensorcores():
    """Best-effort TensorCores-per-chip (width of 'parallel' grid sharding)."""
    try:
        kind = jax.devices()[0].device_kind.lower()
    except Exception:
        return 1
    if "lite" in kind or "v5e" in kind or "v6e" in kind or "v6 lite" in kind:
        return 1  # v5e / v6e: single TensorCore
    if "v7" in kind or "7x" in kind or "v4" in kind or "v5p" in kind:
        return 2  # v7x / v4 / v5p megacore: 2 TensorCores share the grid
    return 1


def _pick_row_tile(rows, c, itemsize, *, num_cores=1,
                   vmem_budget_bytes=14 * 1024 * 1024, steps_per_core=4):
    """Largest row tile that
      * is a multiple of the dtype's sublane packing (f32:8, bf16:16, int8:32),
      * divides `rows` exactly,
      * keeps 2 input + 2 output double-buffers under the smallest scoped-VMEM
        default of any generation (v5e: 16 MiB), and
      * leaves >= steps_per_core pipeline steps per TensorCore sharing the
        'parallel' grid axis (v7x: 2 cores -> >= 8 total grid steps)."""
    sublane = max(8, 32 // max(1, itemsize))
    bytes_per_row = c * itemsize
    vmem_max_rows = max(sublane, vmem_budget_bytes // (4 * bytes_per_row))

    def best_divisor(cap):
        best = None
        for rt_ in range(sublane, min(rows, cap) + 1, sublane):
            if rows % rt_ == 0:
                best = rt_
        return best

    # First honor the per-core pipeline-depth target.
    min_steps = steps_per_core * max(1, num_cores)
    cap = vmem_max_rows
    if rows // min_steps >= sublane:
        cap = min(cap, rows // min_steps)
    rt = best_divisor(cap)
    if rt is None:
        # Relax the step-count target (never the VMEM cap).
        rt = best_divisor(vmem_max_rows)
    if rt is None:
        # No sublane-multiple divisor at all: a full-extent block is always
        # layout-legal; take it only if one input + one output block fit VMEM.
        if 2 * rows * bytes_per_row <= vmem_budget_bytes:
            return rows
        # TODO(synk): masked last block for pathological row counts.
        raise ValueError(
            f"cannot tile rows={rows} (sublane={sublane}) within the "
            f"{vmem_budget_bytes // (1024 * 1024)} MiB VMEM budget")
    return rt


def gelu_pallas(x, *, donate=False):
    """Elementwise exact GELU on an NHWC tensor via a Pallas TPU kernel.

    Set donate=True only when the caller donates `x` (e.g. under jit with
    donate_argnums); aliasing an un-donated buffer would force an extra copy.
    """
    orig_shape = x.shape
    c = orig_shape[-1]
    rows = 1
    for d in orig_shape[:-1]:
        rows *= d
    x2 = x.reshape(rows, c)
    itemsize = x2.dtype.itemsize

    rt = _pick_row_tile(rows, c, itemsize, num_cores=_num_tensorcores())

    cost = pl.CostEstimate(
        flops=4 * rows * c,                      # mul/add around the erf
        transcendentals=rows * c,                # one erf per element
        bytes_accessed=2 * rows * c * itemsize,  # one HBM read + one write
    )

    out = pl.pallas_call(
        _gelu_kernel,
        out_shape=jax.ShapeDtypeStruct((rows, c), x.dtype),
        grid_spec=pltpu.PrefetchScalarGridSpec(
            num_scalar_prefetch=0,
            grid=(rows // rt,),
            in_specs=[pl.BlockSpec((rt, c), lambda i: (i, 0))],
            out_specs=pl.BlockSpec((rt, c), lambda i: (i, 0)),
        ),
        compiler_params=pltpu.CompilerParams(
            dimension_semantics=("parallel",),
        ),
        cost_estimate=cost,
        input_output_aliases=({0: 0} if donate else {}),
    )(x2)
    return out.reshape(orig_shape)


if __name__ == "__main__":
    key = jax.random.PRNGKey(0)
    # small shape consistent with the module's NHWC input [1, H, W, 768]
    x11 = jax.random.normal(key, (1, 16, 16, 768), dtype=jnp.float32)

    y = gelu_pallas(x11)
    jax.block_until_ready(y)

    # reference check against jax.nn.gelu (exact erf form)
    ref = jax.nn.gelu(x11, approximate=False)
    assert jnp.allclose(y, ref, atol=1e-5, rtol=1e-5), "mismatch vs reference"

    print("KERNEL_OK")
</pallas_src>

<mosaic_0001>
module attributes {stable_mosaic.version = 11 : i64} {
  func.func @_gelu_kernel(%arg0: i32, %arg1: memref<64x768xf32, #tpu.memory_space<vmem>>, %arg2: memref<64x768xf32, #tpu.memory_space<vmem>>) attributes {dimension_semantics = [#tpu.dimension_semantics<parallel>], iteration_bounds = array<i64: 4>, scalar_prefetch = 0 : i64, scratch_operands = 0 : i64, tpu.core_type = #tpu.core_type<tc>, window_params = [{transform_indices = @transform_0, window_bounds = array<i64: 64, 768>}, {transform_indices = @transform_1, window_bounds = array<i64: 64, 768>}]} {
    %c0 = arith.constant 0 : index
    %c0_0 = arith.constant 0 : index
    %0 = vector.load %arg1[%c0, %c0_0] : memref<64x768xf32, #tpu.memory_space<vmem>>, vector<64x768xf32>
    %cst = arith.constant 5.000000e-01 : f32
    %1 = vector.broadcast %cst : f32 to vector<64x768xf32>
    %2 = arith.mulf %1, %0 : vector<64x768xf32>
    %cst_1 = arith.constant 0.707106769 : f32
    %3 = vector.broadcast %cst_1 : f32 to vector<64x768xf32>
    %4 = arith.mulf %0, %3 : vector<64x768xf32>
    %5 = math.erf %4 : vector<64x768xf32>
    %cst_2 = arith.constant 1.000000e+00 : f32
    %6 = vector.broadcast %cst_2 : f32 to vector<64x768xf32>
    %7 = arith.addf %6, %5 : vector<64x768xf32>
    %8 = arith.mulf %2, %7 : vector<64x768xf32>
    %c0_3 = arith.constant 0 : index
    %c0_4 = arith.constant 0 : index
    %9 = vector.load %arg2[%c0_3, %c0_4] : memref<64x768xf32, #tpu.memory_space<vmem>>, vector<64x768xf32>
    tpu.vector_store %arg2[%c0_3, %c0_4], %8 {strides = array<i32>} : memref<64x768xf32, #tpu.memory_space<vmem>>, vector<64x768xf32>,
    return
  }
  func.func @transform_0(%arg0: i32) -> (i32, i32) {
    %c0_i32 = arith.constant 0 : i32
    %c0_i32_0 = arith.constant 0 : i32
    return %arg0, %c0_i32 : i32, i32
  }
  func.func @transform_1(%arg0: i32) -> (i32, i32) {
    %c0_i32 = arith.constant 0 : i32
    %c0_i32_0 = arith.constant 0 : i32
    return %arg0, %c0_i32 : i32, i32
  }
}

</mosaic_0001>

<llo_original>
// kernel: tpu_custom_call.1
$region0: #{tpu_custom_call.1}
  #allocation0 [shape = 'u32[]', space=smem, size = 0x4, offset = 0x4, fixed_abs, tag = 'smem constant byte address 0x4 - core index']
  #allocation1 [shape = 'u32[72,128]{1,0:T(1,128)}', space=vmem, size = 0x9000, scoped, tag = 'internal scratch']
  %s0 = inlined_call_operand.hbm [shape: f32[256,768], index: 0, kind: input, shape index: {}]
  %s1 = inlined_call_operand.hbm [shape: f32[256,768], index: 1, kind: output, shape index: {}]
  %s2 = sld [smem:[#allocation0]]
  $region41: #{tpu_custom_call.1} parent=0
    _
  %s4 = ssub.s32 1, %s2
  %s5 = scalar_select 0, %s4, %s2
  $region1: #{tpu_custom_call.1} parent=0
    #allocation2 [shape = 'u8[393216]{0}', space=vmem, size = 0x60000, scoped, tag = 'input window, operand 0']
    #allocation3 [shape = 's32[2]{0}', space=sflag, size = 0x8, scoped, tag = 'scoped memory for tpu_custom_call.1']
    #allocation4 [shape = 's32[2]{0}', space=sflag, size = 0x8, scoped, tag = 'scoped memory for tpu_custom_call.1']
    #allocation5 [shape = 'u8[393216]{0}', space=vmem, size = 0x60000, scoped, tag = 'output window, operand 0']
    %6 = vsyncpa [#allocation3], 0
    %s7 = scalar_lea.sflag [#allocation3], 1
    %8 = vsyncpa %s7, 0
    %9 = vsyncpa [#allocation4], 0
    %s10 = scalar_lea.sflag [#allocation4], 1
    %11 = vsyncpa %s10, 0
    loop: start=0, step=1, limit=6
    $region2: #{tpu_custom_call.1} parent=1 // loop_pre_header
      _
    $region3: #{tpu_custom_call.1} parent=1 // loop_header
      %s13 = sphi 0, %s17
      %p14 = scmp.ge.s32.totalorder %s13, 6
      %s23 = sphi 0, %s25
      %s26 = sphi 0, %s23
      %s27 = sphi 0, %s26
      %s43 = sphi 0, %s27
      %s49 = sphi 0, %s51
      %s52 = sphi 0, %s49
      %s53 = sphi 0, %s52
      %s69 = sphi 0, %s53
    $region4: #{tpu_custom_call.1} parent=1 // loop_header_branch
      %16 = sbr.rel (%p14) target = $region8
    $region5: #{tpu_custom_call.1} parent=1 // loop_body
      %s18 = ssub.s32 %s13, 1
      %s19 = ssub.s32 %s13, 2
      %s20 = sadd.s32 %s13, 1
      %s21 = ssub.s32 %s13, %s20
      %p22 = scmp.eq.s32.totalorder %s21, 0
      %s24 = sadd.s32 %s23, 1
      %s25 = scalar_select %p22, %s23, %s24
      %p28 = pneg %p22
      %p29 = scmp.eq.s32.totalorder %s13, 3
      %p30 = por %p28, %p29
      %p31 = scmp.ne.s32.totalorder %s23, %s26
      %p32 = scmp.eq.s32.totalorder %s13, 0
      %p33 = por %p31, %p32
      %p34 = scmp.ne.s32.totalorder %s23, %s26
      %p35 = scmp.eq.s32.totalorder %s18, 3
      %p36 = por %p34, %p35
      %p37 = scmp.ne.s32.totalorder %s26, %s27
      %p38 = scmp.eq.s32.totalorder %s18, 0
      %p39 = por %p37, %p38
      %p40 = scmp.ne.s32.totalorder %s26, %s27
      %p41 = scmp.eq.s32.totalorder %s19, 3
      %p42 = por %p40, %p41
      %p44 = scmp.ne.s32.totalorder %s27, %s43
      %p45 = scmp.eq.s32.totalorder %s19, 0
      %p46 = por %p44, %p45
      %s47 = ssub.s32 %s13, %s20
      %p48 = scmp.eq.s32.totalorder %s47, 0
      %s50 = sadd.s32 %s49, 1
      %s51 = scalar_select %p48, %s49, %s50
      %p54 = pneg %p48
      %p55 = scmp.eq.s32.totalorder %s13, 3
      %p56 = por %p54, %p55
      %p57 = scmp.ne.s32.totalorder %s49, %s52
      %p58 = scmp.eq.s32.totalorder %s13, 0
      %p59 = por %p57, %p58
      %p60 = scmp.ne.s32.totalorder %s49, %s52
      %p61 = scmp.eq.s32.totalorder %s18, 3
      %p62 = por %p60, %p61
      %p63 = scmp.ne.s32.totalorder %s52, %s53
      %p64 = scmp.eq.s32.totalorder %s18, 0
      %p65 = por %p63, %p64
      %p66 = scmp.ne.s32.totalorder %s52, %s53
      %p67 = scmp.eq.s32.totalorder %s19, 3
      %p68 = por %p66, %p67
      %p70 = scmp.ne.s32.totalorder %s53, %s69
      %p71 = scmp.eq.s32.totalorder %s19, 0
      %p72 = por %p70, %p71
      %p73 = scmp.le.s32.totalorder 1, %s13
      %p74 = scmp.lt.s32.totalorder %s13, 5
      %p75 = pnand %p73, %p74
      %p76 = pneg %p75
      // Predicated region
      $region9: #{tpu_custom_call.1} parent=5 // pred_check
        _
      $region10: #{tpu_custom_call.1} parent=5 // pred_check_branch
        %78 = sbr.rel (%p75) target = $region12
      $region11: #{tpu_custom_call.1} parent=5 // pred_region
        %s79 = ssub.s32 %s13, 1
      $region12: #{tpu_custom_call.1} parent=5 // pred_fallthru
        _
      %p80 = scmp.lt.s32.totalorder %s13, 4
      // Predicated region
      $region13: #{tpu_custom_call.1} parent=5 // pred_check
        %p81 = pneg %p80
      $region14: #{tpu_custom_call.1} parent=5 // pred_check_branch
        %83 = sbr.rel (%p81) target = $region16
      $region15: #{tpu_custom_call.1} parent=5 // pred_region
        // Predicated region
        $region17: #{tpu_custom_call.1} parent=15 // pred_check
          %p84 = pneg %p33
        $region18: #{tpu_custom_call.1} parent=15 // pred_check_branch
          %86 = sbr.rel (%p84) target = $region20
        $region19: #{tpu_custom_call.1} parent=15 // pred_region
          %s87 = sand.u32 %s23, 1
          %s88 = scalar_lea.sflag [#allocation3], %s87
          %s89 = sand.u32 %s23, 1
          %s90 = smul.addr %s89, 384
          %s91 = scalar_lea.vmem [#allocation2], %s90
          %s92 = smul.u32 8, %s13
          %94 = vsyncadd %s88, 0
          %s95 = smul.addr %s92, 6
          %s96 = smul.addr %s95, 8
          %s97 = scalar_lea.hbm %s0, %s96
          %s98 = sshll.u32 %s97, 4
          %s99 = int_to_ptr.hbm [resolvable:$true] %s98
          %s100 = sshll.u32 %s91, 4
          %s101 = int_to_ptr.vmem [resolvable:$true] %s100
          %106 = dma.hbm_to_vmem [thread:$0]  %s99, 6144, %s101, %s88, 768, 768, 48
        $region20: #{tpu_custom_call.1} parent=15 // pred_fallthru
          _
      $region16: #{tpu_custom_call.1} parent=5 // pred_fallthru
        _
      %p107 = scmp.le.s32.totalorder 1, %s13
      %p108 = scmp.lt.s32.totalorder %s13, 5
      %p109 = pnand %p107, %p108
      %p110 = pneg %p109
      // Predicated region
      $region21: #{tpu_custom_call.1} parent=5 // pred_check
        _
      $region22: #{tpu_custom_call.1} parent=5 // pred_check_branch
        %112 = sbr.rel (%p109) target = $region24
      $region23: #{tpu_custom_call.1} parent=5 // pred_region
        %s113 = ssub.s32 %s13, 1
        %s114 = sand.u32 %s26, 1
        %s115 = scalar_lea.sflag [#allocation3], %s114
        %s116 = sand.u32 %s26, 1
        %s117 = smul.addr %s116, 384
        %s118 = scalar_lea.vmem [#allocation2], %s117
        // Predicated region
        $region25: #{tpu_custom_call.1} parent=23 // pred_check
          %p119 = pneg %p39
        $region26: #{tpu_custom_call.1} parent=23 // pred_check_branch
          %121 = sbr.rel (%p119) target = $region28
        $region27: #{tpu_custom_call.1} parent=23 // pred_region
          %123 = dma.done %s115, 6144
        $region28: #{tpu_custom_call.1} parent=23 // pred_fallthru
          _
        %s124 = sand.u32 %s26, 1
        %s125 = scalar_lea.sflag [#allocation3], %s124
        %s126 = sand.u32 %s26, 1
        %s127 = smul.addr %s126, 384
        %s128 = scalar_lea.vmem [#allocation2], %s127
        %p129 = pneg %p39
        %p130 = pneg %p36
        %p131 = pneg %p65
        %p132 = pneg %p62
        %s133 = sand.u32 %s52, 1
        %s134 = scalar_lea.sflag [#allocation4], %s133
        %s135 = sand.u32 %s52, 1
        %s136 = smul.addr %s135, 384
        %s137 = scalar_lea.vmem [#allocation5], %s136
        %s138 = smul.u32 8, %s18
        %s139 = smul.u32 8, %s18
        %v140 = vld [vmem:[%s118] sm:$0xff]
        %v141 = vld [vmem:[%s118 + $0x8] sm:$0xff]
        %v142 = vld [vmem:[%s118 + $0x10] sm:$0xff]
        %v143 = vld [vmem:[%s118 + $0x18] sm:$0xff]
        %v144 = vld [vmem:[%s118 + $0x20] sm:$0xff]
        %v145 = vld [vmem:[%s118 + $0x28] sm:$0xff]
        %v146 = vld [vmem:[%s118 + $0x30] sm:$0xff]
        %v147 = vld [vmem:[%s118 + $0x38] sm:$0xff]
        %v148 = vld [vmem:[%s118 + $0x40] sm:$0xff]
        %v149 = vld [vmem:[%s118 + $0x48] sm:$0xff]
        %v150 = vld [vmem:[%s118 + $0x50] sm:$0xff]
        %v151 = vld [vmem:[%s118 + $0x58] sm:$0xff]
        %v152 = vld [vmem:[%s118 + $0x60] sm:$0xff]
        %v153 = vld [vmem:[%s118 + $0x68] sm:$0xff]
        %v154 = vld [vmem:[%s118 + $0x70] sm:$0xff]
        %v155 = vld [vmem:[%s118 + $0x78] sm:$0xff]
        %v156 = vld [vmem:[%s118 + $0x80] sm:$0xff]
        %v157 = vld [vmem:[%s118 + $0x88] sm:$0xff]
        %v158 = vld [vmem:[%s118 + $0x90] sm:$0xff]
        %v159 = vld [vmem:[%s118 + $0x98] sm:$0xff]
        %v160 = vld [vmem:[%s118 + $0xa0] sm:$0xff]
        %v161 = vld [vmem:[%s118 + $0xa8] sm:$0xff]
        %v162 = vld [vmem:[%s118 + $0xb0] sm:$0xff]
        %v163 = vld [vmem:[%s118 + $0xb8] sm:$0xff]
        %v164 = vld [vmem:[%s118 + $0xc0] sm:$0xff]
        %v165 = vld [vmem:[%s118 + $0xc8] sm:$0xff]
        %v166 = vld [vmem:[%s118 + $0xd0] sm:$0xff]
        %v167 = vld [vmem:[%s118 + $0xd8] sm:$0xff]
        %v168 = vld [vmem:[%s118 + $0xe0] sm:$0xff]
        %v169 = vld [vmem:[%s118 + $0xe8] sm:$0xff]
        %v170 = vld [vmem:[%s118 + $0xf0] sm:$0xff]
        %v171 = vld [vmem:[%s118 + $0xf8] sm:$0xff]
        %v172 = vld [vmem:[%s118 + $0x100] sm:$0xff]
        %v173 = vld [vmem:[%s118 + $0x108] sm:$0xff]
        %v174 = vld [vmem:[%s118 + $0x110] sm:$0xff]
        %v175 = vld [vmem:[%s118 + $0x118] sm:$0xff]
        %v176 = vld [vmem:[%s118 + $0x120] sm:$0xff]
        %v177 = vld [vmem:[%s118 + $0x128] sm:$0xff]
        %v178 = vld [vmem:[%s118 + $0x130] sm:$0xff]
        %v179 = vld [vmem:[%s118 + $0x138] sm:$0xff]
        %v180 = vld [vmem:[%s118 + $0x140] sm:$0xff]
        %v181 = vld [vmem:[%s118 + $0x148] sm:$0xff]
        %v182 = vld [vmem:[%s118 + $0x150] sm:$0xff]
        %v183 = vld [vmem:[%s118 + $0x158] sm:$0xff]
        %v184 = vld [vmem:[%s118 + $0x160] sm:$0xff]
        %v185 = vld [vmem:[%s118 + $0x168] sm:$0xff]
        %v186 = vld [vmem:[%s118 + $0x170] sm:$0xff]
        %v187 = vld [vmem:[%s118 + $0x178] sm:$0xff]
        %v188 = vmul.f32 %v140, 0.5
        %v189 = vmul.f32 %v141, 0.5
        %v190 = vmul.f32 %v142, 0.5
        %v191 = vmul.f32 %v143, 0.5
        %v192 = vmul.f32 %v144, 0.5
        %v193 = vmul.f32 %v145, 0.5
        %v194 = vmul.f32 %v146, 0.5
        %v195 = vmul.f32 %v147, 0.5
        %v196 = vmul.f32 %v148, 0.5
        %v197 = vmul.f32 %v149, 0.5
        %v198 = vmul.f32 %v150, 0.5
        %v199 = vmul.f32 %v151, 0.5
        %v200 = vmul.f32 %v152, 0.5
        %v201 = vmul.f32 %v153, 0.5
        %v202 = vmul.f32 %v154, 0.5
        %v203 = vmul.f32 %v155, 0.5
        %v204 = vmul.f32 %v156, 0.5
        %v205 = vmul.f32 %v157, 0.5
        %v206 = vmul.f32 %v158, 0.5
        %v207 = vmul.f32 %v159, 0.5
        %v208 = vmul.f32 %v160, 0.5
        %v209 = vmul.f32 %v161, 0.5
        %v210 = vmul.f32 %v162, 0.5
        %v211 = vmul.f32 %v163, 0.5
        %v212 = vmul.f32 %v164, 0.5
        %v213 = vmul.f32 %v165, 0.5
        %v214 = vmul.f32 %v166, 0.5
        %v215 = vmul.f32 %v167, 0.5
        %v216 = vmul.f32 %v168, 0.5
        %v217 = vmul.f32 %v169, 0.5
        %v218 = vmul.f32 %v170, 0.5
        %v219 = vmul.f32 %v171, 0.5
        %v220 = vmul.f32 %v172, 0.5
        %v221 = vmul.f32 %v173, 0.5
        %v222 = vmul.f32 %v174, 0.5
        %v223 = vmul.f32 %v175, 0.5
        %v224 = vmul.f32 %v176, 0.5
        %v225 = vmul.f32 %v177, 0.5
        %v226 = vmul.f32 %v178, 0.5
        %v227 = vmul.f32 %v179, 0.5
        %v228 = vmul.f32 %v180, 0.5
        %v229 = vmul.f32 %v181, 0.5
        %v230 = vmul.f32 %v182, 0.5
        %v231 = vmul.f32 %v183, 0.5
        %v232 = vmul.f32 %v184, 0.5
        %v233 = vmul.f32 %v185, 0.5
        %v234 = vmul.f32 %v186, 0.5
        %v235 = vmul.f32 %v187, 0.5
        %v236 = vmul.f32 %v140, 0.70710677
        %v237 = vmul.f32 %v141, 0.70710677
        %v238 = vmul.f32 %v142, 0.70710677
        %v239 = vmul.f32 %v143, 0.70710677
        %v240 = vmul.f32 %v144, 0.70710677
        %v241 = vmul.f32 %v145, 0.70710677
        %v242 = vmul.f32 %v146, 0.70710677
        %v243 = vmul.f32 %v147, 0.70710677
        %v244 = vmul.f32 %v148, 0.70710677
        %v245 = vmul.f32 %v149, 0.70710677
        %v246 = vmul.f32 %v150, 0.70710677
        %v247 = vmul.f32 %v151, 0.70710677
        %v248 = vmul.f32 %v152, 0.70710677
        %v249 = vmul.f32 %v153, 0.70710677
        %v250 = vmul.f32 %v154, 0.70710677
        %v251 = vmul.f32 %v155, 0.70710677
        %v252 = vmul.f32 %v156, 0.70710677
        %v253 = vmul.f32 %v157, 0.70710677
        %v254 = vmul.f32 %v158, 0.70710677
        %v255 = vmul.f32 %v159, 0.70710677
        %v256 = vmul.f32 %v160, 0.70710677
        %v257 = vmul.f32 %v161, 0.70710677
        %v258 = vmul.f32 %v162, 0.70710677
        %v259 = vmul.f32 %v163, 0.70710677
        %v260 = vmul.f32 %v164, 0.70710677
        %v261 = vmul.f32 %v165, 0.70710677
        %v262 = vmul.f32 %v166, 0.70710677
        %v263 = vmul.f32 %v167, 0.70710677
        %v264 = vmul.f32 %v168, 0.70710677
        %v265 = vmul.f32 %v169, 0.70710677
        %v266 = vmul.f32 %v170, 0.70710677
        %v267 = vmul.f32 %v171, 0.70710677
        %v268 = vmul.f32 %v172, 0.70710677
        %v269 = vmul.f32 %v173, 0.70710677
        %v270 = vmul.f32 %v174, 0.70710677
        %v271 = vmul.f32 %v175, 0.70710677
        %v272 = vmul.f32 %v176, 0.70710677
        %v273 = vmul.f32 %v177, 0.70710677
        %v274 = vmul.f32 %v178, 0.70710677
        %v275 = vmul.f32 %v179, 0.70710677
        %v276 = vmul.f32 %v180, 0.70710677
        %v277 = vmul.f32 %v181, 0.70710677
        %v278 = vmul.f32 %v182, 0.70710677
        %v279 = vmul.f32 %v183, 0.70710677
        %v280 = vmul.f32 %v184, 0.70710677
        %v281 = vmul.f32 %v185, 0.70710677
        %v282 = vmul.f32 %v186, 0.70710677
        %v283 = vmul.f32 %v187, 0.70710677
        %v284 = vmul.f32 %v236, %v236
        %v285 = vmin.f32 16.0, %v284
        %v286 = vmul.f32 %v285, 2.1237322e-06
        %v287 = vadd.f32 %v286, 0.00028619796
        %v288 = vmul.f32 %v285, %v287
        %v289 = vadd.f32 %v288, 0.0036580483
        %v290 = vmul.f32 %v285, %v289
        %v291 = vadd.f32 %v290, 0.05243302
        %v292 = vmul.f32 %v285, %v291
        %v293 = vadd.f32 %v292, 0.18741608
        %v294 = vmul.f32 %v285, %v293
        %v295 = vadd.f32 %v294, 1.1283791
        %v296 = vmul.f32 %v236, %v295
        %v297 = vmul.f32 %v285, 3.8918573e-05
        %v298 = vadd.f32 %v297, 0.001143296
        %v299 = vmul.f32 %v285, %v298
        %v300 = vadd.f32 %v299, 0.014752088
        %v301 = vmul.f32 %v285, %v300
        %v302 = vadd.f32 %v301, 0.112945676
        %v303 = vmul.f32 %v285, %v302
        %v304 = vadd.f32 %v303, 0.4994258
        %v305 = vmul.f32 %v285, %v304
        %v306 = vadd.f32 %v305, 1.0
        %v307 = vrcp.pop %v306
        %v308 = vmul.f32 %v306, %v307
        %v309 = vsub.f32 1.0, %v308
        %v310 = vmul.f32 %v307, %v309
        %v311 = vadd.f32 %v307, %v310
        %vm312 = vweird.f32 %v306
        %vm313 = vweird.f32 %v307
        %vm314 = vmor %vm312, %vm313
        %v315 = vsel %vm314, %v307, %v311
        %v316 = vand.u32 2147483647, %v306
        %vm317 = vcmp.eq.f32.partialorder %v316, 8.507059e+37
        %v318 = vand.u32 %v306, 2147483648
        %v319 = vor.u32 1.1754944e-38, %v318
        %v320 = vsel %vm317, %v319, %v315
        %v321 = vmul.f32 %v296, %v320
        %v322 = vmin.f32 %v321, 1.0
        %v323 = vmax.f32 %v322, -1.0
        %v324 = vmul.f32 %v237, %v237
        %v325 = vmin.f32 16.0, %v324
        %v326 = vmul.f32 %v325, 2.1237322e-06
        %v327 = vadd.f32 %v326, 0.00028619796
        %v328 = vmul.f32 %v325, %v327
        %v329 = vadd.f32 %v328, 0.0036580483
        %v330 = vmul.f32 %v325, %v329
        %v331 = vadd.f32 %v330, 0.05243302
        %v332 = vmul.f32 %v325, %v331
        %v333 = vadd.f32 %v332, 0.18741608
        %v334 = vmul.f32 %v325, %v333
        %v335 = vadd.f32 %v334, 1.1283791
        %v336 = vmul.f32 %v237, %v335
        %v337 = vmul.f32 %v325, 3.8918573e-05
        %v338 = vadd.f32 %v337, 0.001143296
        %v339 = vmul.f32 %v325, %v338
        %v340 = vadd.f32 %v339, 0.014752088
        %v341 = vmul.f32 %v325, %v340
        %v342 = vadd.f32 %v341, 0.112945676
        %v343 = vmul.f32 %v325, %v342
        %v344 = vadd.f32 %v343, 0.4994258
        %v345 = vmul.f32 %v325, %v344
        %v346 = vadd.f32 %v345, 1.0
        %v347 = vrcp.pop %v346
        %v348 = vmul.f32 %v346, %v347
        %v349 = vsub.f32 1.0, %v348
        %v350 = vmul.f32 %v347, %v349
        %v351 = vadd.f32 %v347, %v350
        %vm352 = vweird.f32 %v346
        %vm353 = vweird.f32 %v347
        %vm354 = vmor %vm352, %vm353
        %v355 = vsel %vm354, %v347, %v351
        %v356 = vand.u32 2147483647, %v346
        %vm357 = vcmp.eq.f32.partialorder %v356, 8.507059e+37
        %v358 = vand.u32 %v346, 2147483648
        %v359 = vor.u32 1.1754944e-38, %v358
        %v360 = vsel %vm357, %v359, %v355
        %v361 = vmul.f32 %v336, %v360
        %v362 = vmin.f32 %v361, 1.0
        %v363 = vmax.f32 %v362, -1.0
        %v364 = vmul.f32 %v238, %v238
        %v365 = vmin.f32 16.0, %v364
        %v366 = vmul.f32 %v365, 2.1237322e-06
        %v367 = vadd.f32 %v366, 0.00028619796
        %v368 = vmul.f32 %v365, %v367
        %v369 = vadd.f32 %v368, 0.0036580483
        %v370 = vmul.f32 %v365, %v369
        %v371 = vadd.f32 %v370, 0.05243302
        %v372 = vmul.f32 %v365, %v371
        %v373 = vadd.f32 %v372, 0.18741608
        %v374 = vmul.f32 %v365, %v373
        %v375 = vadd.f32 %v374, 1.1283791
        %v376 = vmul.f32 %v238, %v375
        %v377 = vmul.f32 %v365, 3.8918573e-05
        %v378 = vadd.f32 %v377, 0.001143296
        %v379 = vmul.f32 %v365, %v378
        %v380 = vadd.f32 %v379, 0.014752088
        %v381 = vmul.f32 %v365, %v380
        %v382 = vadd.f32 %v381, 0.112945676
        %v383 = vmul.f32 %v365, %v382
        %v384 = vadd.f32 %v383, 0.4994258
        %v385 = vmul.f32 %v365, %v384
        %v386 = vadd.f32 %v385, 1.0
        %v387 = vrcp.pop %v386
        %v388 = vmul.f32 %v386, %v387
        %v389 = vsub.f32 1.0, %v388
        %v390 = vmul.f32 %v387, %v389
        %v391 = vadd.f32 %v387, %v390
        %vm392 = vweird.f32 %v386
        %vm393 = vweird.f32 %v387
        %vm394 = vmor %vm392, %vm393
        %v395 = vsel %vm394, %v387, %v391
        %v396 = vand.u32 2147483647, %v386
        %vm397 = vcmp.eq.f32.partialorder %v396, 8.507059e+37
        %v398 = vand.u32 %v386, 2147483648
        %v399 = vor.u32 1.1754944e-38, %v398
        %v400 = vsel %vm397, %v399, %v395
        %v401 = vmul.f32 %v376, %v400
        %v402 = vmin.f32 %v401, 1.0
        %v403 = vmax.f32 %v402, -1.0
        %v404 = vmul.f32 %v239, %v239
        %v405 = vmin.f32 16.0, %v404
        %v406 = vmul.f32 %v405, 2.1237322e-06
        %v407 = vadd.f32 %v406, 0.00028619796
        %v408 = vmul.f32 %v405, %v407
        %v409 = vadd.f32 %v408, 0.0036580483
        %v410 = vmul.f32 %v405, %v409
        %v411 = vadd.f32 %v410, 0.05243302
        %v412 = vmul.f32 %v405, %v411
        %v413 = vadd.f32 %v412, 0.18741608
        %v414 = vmul.f32 %v405, %v413
        %v415 = vadd.f32 %v414, 1.1283791
        %v416 = vmul.f32 %v239, %v415
        %v417 = vmul.f32 %v405, 3.8918573e-05
        %v418 = vadd.f32 %v417, 0.001143296
        %v419 = vmul.f32 %v405, %v418
        %v420 = vadd.f32 %v419, 0.014752088
        %v421 = vmul.f32 %v405, %v420
        %v422 = vadd.f32 %v421, 0.112945676
        %v423 = vmul.f32 %v405, %v422
        %v424 = vadd.f32 %v423, 0.4994258
        %v425 = vmul.f32 %v405, %v424
        %v426 = vadd.f32 %v425, 1.0
        %v427 = vrcp.pop %v426
        %v428 = vmul.f32 %v426, %v427
        %v429 = vsub.f32 1.0, %v428
        %v430 = vmul.f32 %v427, %v429
        %v431 = vadd.f32 %v427, %v430
        %vm432 = vweird.f32 %v426
        %vm433 = vweird.f32 %v427
        %vm434 = vmor %vm432, %vm433
        %v435 = vsel %vm434, %v427, %v431
        %v436 = vand.u32 2147483647, %v426
        %vm437 = vcmp.eq.f32.partialorder %v436, 8.507059e+37
        %v438 = vand.u32 %v426, 2147483648
        %v439 = vor.u32 1.1754944e-38, %v438
        %v440 = vsel %vm437, %v439, %v435
        %v441 = vmul.f32 %v416, %v440
        %v442 = vmin.f32 %v441, 1.0
        %v443 = vmax.f32 %v442, -1.0
        %v444 = vmul.f32 %v240, %v240
        %v445 = vmin.f32 16.0, %v444
        %v446 = vmul.f32 %v445, 2.1237322e-06
        %v447 = vadd.f32 %v446, 0.00028619796
        %v448 = vmul.f32 %v445, %v447
        %v449 = vadd.f32 %v448, 0.0036580483
        %v450 = vmul.f32 %v445, %v449
        %v451 = vadd.f32 %v450, 0.05243302
        %v452 = vmul.f32 %v445, %v451
        %v453 = vadd.f32 %v452, 0.18741608
        %v454 = vmul.f32 %v445, %v453
        %v455 = vadd.f32 %v454, 1.1283791
        %v456 = vmul.f32 %v240, %v455
        %v457 = vmul.f32 %v445, 3.8918573e-05
        %v458 = vadd.f32 %v457, 0.001143296
        %v459 = vmul.f32 %v445, %v458
        %v460 = vadd.f32 %v459, 0.014752088
        %v461 = vmul.f32 %v445, %v460
        %v462 = vadd.f32 %v461, 0.112945676
        %v463 = vmul.f32 %v445, %v462
        %v464 = vadd.f32 %v463, 0.4994258
        %v465 = vmul.f32 %v445, %v464
        %v466 = vadd.f32 %v465, 1.0
        %v467 = vrcp.pop %v466
        %v468 = vmul.f32 %v466, %v467
        %v469 = vsub.f32 1.0, %v468
        %v470 = vmul.f32 %v467, %v469
        %v471 = vadd.f32 %v467, %v470
        %vm472 = vweird.f32 %v466
        %vm473 = vweird.f32 %v467
        %vm474 = vmor %vm472, %vm473
        %v475 = vsel %vm474, %v467, %v471
        %v476 = vand.u32 2147483647, %v466
        %vm477 = vcmp.eq.f32.partialorder %v476, 8.507059e+37
        %v478 = vand.u32 %v466, 2147483648
        %v479 = vor.u32 1.1754944e-38, %v478
        %v480 = vsel %vm477, %v479, %v475
        %v481 = vmul.f32 %v456, %v480
        %v482 = vmin.f32 %v481, 1.0
        %v483 = vmax.f32 %v482, -1.0
        %v484 = vmul.f32 %v241, %v241
        %v485 = vmin.f32 16.0, %v484
        %v486 = vmul.f32 %v485, 2.1237322e-06
        %v487 = vadd.f32 %v486, 0.00028619796
        %v488 = vmul.f32 %v485, %v487
        %v489 = vadd.f32 %v488, 0.0036580483
        %v490 = vmul.f32 %v485, %v489
        %v491 = vadd.f32 %v490, 0.05243302
        %v492 = vmul.f32 %v485, %v491
        %v493 = vadd.f32 %v492, 0.18741608
        %v494 = vmul.f32 %v485, %v493
        %v495 = vadd.f32 %v494, 1.1283791
        %v496 = vmul.f32 %v241, %v495
        %v497 = vmul.f32 %v485, 3.8918573e-05
        %v498 = vadd.f32 %v497, 0.001143296
        %v499 = vmul.f32 %v485, %v498
        %v500 = vadd.f32 %v499, 0.014752088
        %v501 = vmul.f32 %v485, %v500
        %v502 = vadd.f32 %v501, 0.112945676
        %v503 = vmul.f32 %v485, %v502
        %v504 = vadd.f32 %v503, 0.4994258
        %v505 = vmul.f32 %v485, %v504
        %v506 = vadd.f32 %v505, 1.0
        %v507 = vrcp.pop %v506
        %v508 = vmul.f32 %v506, %v507
        %v509 = vsub.f32 1.0, %v508
        %v510 = vmul.f32 %v507, %v509
        %v511 = vadd.f32 %v507, %v510
        %vm512 = vweird.f32 %v506
        %vm513 = vweird.f32 %v507
        %vm514 = vmor %vm512, %vm513
        %v515 = vsel %vm514, %v507, %v511
        %v516 = vand.u32 2147483647, %v506
        %vm517 = vcmp.eq.f32.partialorder %v516, 8.507059e+37
        %v518 = vand.u32 %v506, 2147483648
        %v519 = vor.u32 1.1754944e-38, %v518
        %v520 = vsel %vm517, %v519, %v515
        %v521 = vmul.f32 %v496, %v520
        %v522 = vmin.f32 %v521, 1.0
        %v523 = vmax.f32 %v522, -1.0
        %v524 = vmul.f32 %v242, %v242
        %v525 = vmin.f32 16.0, %v524
        %v526 = vmul.f32 %v525, 2.1237322e-06
        %v527 = vadd.f32 %v526, 0.00028619796
        %v528 = vmul.f32 %v525, %v527
        %v529 = vadd.f32 %v528, 0.0036580483
        %v530 = vmul.f32 %v525, %v529
        %v531 = vadd.f32 %v530, 0.05243302
        %v532 = vmul.f32 %v525, %v531
        %v533 = vadd.f32 %v532, 0.18741608
        %v534 = vmul.f32 %v525, %v533
        %v535 = vadd.f32 %v534, 1.1283791
        %v536 = vmul.f32 %v242, %v535
        %v537 = vmul.f32 %v525, 3.8918573e-05
        %v538 = vadd.f32 %v537, 0.001143296
        %v539 = vmul.f32 %v525, %v538
        %v540 = vadd.f32 %v539, 0.014752088
        %v541 = vmul.f32 %v525, %v540
        %v542 = vadd.f32 %v541, 0.112945676
        %v543 = vmul.f32 %v525, %v542
        %v544 = vadd.f32 %v543, 0.4994258
        %v545 = vmul.f32 %v525, %v544
        %v546 = vadd.f32 %v545, 1.0
        %v547 = vrcp.pop %v546
        %v548 = vmul.f32 %v546, %v547
        %v549 = vsub.f32 1.0, %v548
        %v550 = vmul.f32 %v547, %v549
        %v551 = vadd.f32 %v547, %v550
        %vm552 = vweird.f32 %v546
        %vm553 = vweird.f32 %v547
        %vm554 = vmor %vm552, %vm553
        %v555 = vsel %vm554, %v547, %v551
        %v556 = vand.u32 2147483647, %v546
        %vm557 = vcmp.eq.f32.partialorder %v556, 8.507059e+37
        %v558 = vand.u32 %v546, 2147483648
        %v559 = vor.u32 1.1754944e-38, %v558
        %v560 = vsel %vm557, %v559, %v555
        %v561 = vmul.f32 %v536, %v560
        %v562 = vmin.f32 %v561, 1.0
        %v563 = vmax.f32 %v562, -1.0
        %v564 = vmul.f32 %v243, %v243
        %v565 = vmin.f32 16.0, %v564
        %v566 = vmul.f32 %v565, 2.1237322e-06
        %v567 = vadd.f32 %v566, 0.00028619796
        %v568 = vmul.f32 %v565, %v567
        %v569 = vadd.f32 %v568, 0.0036580483
        %v570 = vmul.f32 %v565, %v569
        %v571 = vadd.f32 %v570, 0.05243302
        %v572 = vmul.f32 %v565, %v571
        %v573 = vadd.f32 %v572, 0.18741608
        %v574 = vmul.f32 %v565, %v573
        %v575 = vadd.f32 %v574, 1.1283791
        %v576 = vmul.f32 %v243, %v575
        %v577 = vmul.f32 %v565, 3.8918573e-05
        %v578 = vadd.f32 %v577, 0.001143296
        %v579 = vmul.f32 %v565, %v578
        %v580 = vadd.f32 %v579, 0.014752088
        %v581 = vmul.f32 %v565, %v580
        %v582 = vadd.f32 %v581, 0.112945676
        %v583 = vmul.f32 %v565, %v582
        %v584 = vadd.f32 %v583, 0.4994258
        %v585 = vmul.f32 %v565, %v584
        %v586 = vadd.f32 %v585, 1.0
        %v587 = vrcp.pop %v586
        %v588 = vmul.f32 %v586, %v587
        %v589 = vsub.f32 1.0, %v588
        %v590 = vmul.f32 %v587, %v589
        %v591 = vadd.f32 %v587, %v590
        %vm592 = vweird.f32 %v586
        %vm593 = vweird.f32 %v587
        %vm594 = vmor %vm592, %vm593
        %v595 = vsel %vm594, %v587, %v591
        %v596 = vand.u32 2147483647, %v586
        %vm597 = vcmp.eq.f32.partialorder %v596, 8.507059e+37
        %v598 = vand.u32 %v586, 2147483648
        %v599 = vor.u32 1.1754944e-38, %v598
        %v600 = vsel %vm597, %v599, %v595
        %v601 = vmul.f32 %v576, %v600
        %v602 = vmin.f32 %v601, 1.0
        %v603 = vmax.f32 %v602, -1.0
        %v604 = vmul.f32 %v244, %v244
        %v605 = vmin.f32 16.0, %v604
        %v606 = vmul.f32 %v605, 2.1237322e-06
        %v607 = vadd.f32 %v606, 0.00028619796
        %v608 = vmul.f32 %v605, %v607
        %v609 = vadd.f32 %v608, 0.0036580483
        %v610 = vmul.f32 %v605, %v609
        %v611 = vadd.f32 %v610, 0.05243302
        %v612 = vmul.f32 %v605, %v611
        %v613 = vadd.f32 %v612, 0.18741608
        %v614 = vmul.f32 %v605, %v613
        %v615 = vadd.f32 %v614, 1.1283791
        %v616 = vmul.f32 %v244, %v615
        %v617 = vmul.f32 %v605, 3.8918573e-05
        %v618 = vadd.f32 %v617, 0.001143296
        %v619 = vmul.f32 %v605, %v618
        %v620 = vadd.f32 %v619, 0.014752088
        %v621 = vmul.f32 %v605, %v620
        %v622 = vadd.f32 %v621, 0.112945676
        %v623 = vmul.f32 %v605, %v622
        %v624 = vadd.f32 %v623, 0.4994258
        %v625 = vmul.f32 %v605, %v624
        %v626 = vadd.f32 %v625, 1.0
        %v627 = vrcp.pop %v626
        %v628 = vmul.f32 %v626, %v627
        %v629 = vsub.f32 1.0, %v628
        %v630 = vmul.f32 %v627, %v629
        %v631 = vadd.f32 %v627, %v630
        %vm632 = vweird.f32 %v626
        %vm633 = vweird.f32 %v627
        %vm634 = vmor %vm632, %vm633
        %v635 = vsel %vm634, %v627, %v631
        %v636 = vand.u32 2147483647, %v626
        %vm637 = vcmp.eq.f32.partialorder %v636, 8.507059e+37
        %v638 = vand.u32 %v626, 2147483648
        %v639 = vor.u32 1.1754944e-38, %v638
        %v640 = vsel %vm637, %v639, %v635
        %v641 = vmul.f32 %v616, %v640
        %v642 = vmin.f32 %v641, 1.0
        %v643 = vmax.f32 %v642, -1.0
        %v644 = vmul.f32 %v245, %v245
        %v645 = vmin.f32 16.0, %v644
        %v646 = vmul.f32 %v645, 2.1237322e-06
        %v647 = vadd.f32 %v646, 0.00028619796
        %v648 = vmul.f32 %v645, %v647
        %v649 = vadd.f32 %v648, 0.0036580483
        %v650 = vmul.f32 %v645, %v649
        %v651 = vadd.f32 %v650, 0.05243302
        %v652 = vmul.f32 %v645, %v651
        %v653 = vadd.f32 %v652, 0.18741608
        %v654 = vmul.f32 %v645, %v653
        %v655 = vadd.f32 %v654, 1.1283791
        %v656 = vmul.f32 %v245, %v655
        %v657 = vmul.f32 %v645, 3.8918573e-05
        %v658 = vadd.f32 %v657, 0.001143296
        %v659 = vmul.f32 %v645, %v658
        %v660 = vadd.f32 %v659, 0.014752088
        %v661 = vmul.f32 %v645, %v660
        %v662 = vadd.f32 %v661, 0.112945676
        %v663 = vmul.f32 %v645, %v662
        %v664 = vadd.f32 %v663, 0.4994258
        %v665 = vmul.f32 %v645, %v664
        %v666 = vadd.f32 %v665, 1.0
        %v667 = vrcp.pop %v666
        %v668 = vmul.f32 %v666, %v667
        %v669 = vsub.f32 1.0, %v668
        %v670 = vmul.f32 %v667, %v669
        %v671 = vadd.f32 %v667, %v670
        %vm672 = vweird.f32 %v666
        %vm673 = vweird.f32 %v667
        %vm674 = vmor %vm672, %vm673
        %v675 = vsel %vm674, %v667, %v671
        %v676 = vand.u32 2147483647, %v666
        %vm677 = vcmp.eq.f32.partialorder %v676, 8.507059e+37
        %v678 = vand.u32 %v666, 2147483648
        %v679 = vor.u32 1.1754944e-38, %v678
        %v680 = vsel %vm677, %v679, %v675
        %v681 = vmul.f32 %v656, %v680
        %v682 = vmin.f32 %v681, 1.0
        %v683 = vmax.f32 %v682, -1.0
        %v684 = vmul.f32 %v246, %v246
        %v685 = vmin.f32 16.0, %v684
        %v686 = vmul.f32 %v685, 2.1237322e-06
        %v687 = vadd.f32 %v686, 0.00028619796
        %v688 = vmul.f32 %v685, %v687
        %v689 = vadd.f32 %v688, 0.0036580483
        %v690 = vmul.f32 %v685, %v689
        %v691 = vadd.f32 %v690, 0.05243302
        %v692 = vmul.f32 %v685, %v691
        %v693 = vadd.f32 %v692, 0.18741608
        %v694 = vmul.f32 %v685, %v693
        %v695 = vadd.f32 %v694, 1.1283791
        %v696 = vmul.f32 %v246, %v695
        %v697 = vmul.f32 %v685, 3.8918573e-05
        %v698 = vadd.f32 %v697, 0.001143296
        %v699 = vmul.f32 %v685, %v698
        %v700 = vadd.f32 %v699, 0.014752088
        %v701 = vmul.f32 %v685, %v700
        %v702 = vadd.f32 %v701, 0.112945676
        %v703 = vmul.f32 %v685, %v702
        %v704 = vadd.f32 %v703, 0.4994258
        %v705 = vmul.f32 %v685, %v704
        %v706 = vadd.f32 %v705, 1.0
        %v707 = vrcp.pop %v706
        %v708 = vmul.f32 %v706, %v707
        %v709 = vsub.f32 1.0, %v708
        %v710 = vmul.f32 %v707, %v709
        %v711 = vadd.f32 %v707, %v710
        %vm712 = vweird.f32 %v706
        %vm713 = vweird.f32 %v707
        %vm714 = vmor %vm712, %vm713
        %v715 = vsel %vm714, %v707, %v711
        %v716 = vand.u32 2147483647, %v706
        %vm717 = vcmp.eq.f32.partialorder %v716, 8.507059e+37
        %v718 = vand.u32 %v706, 2147483648
        %v719 = vor.u32 1.1754944e-38, %v718
        %v720 = vsel %vm717, %v719, %v715
        %v721 = vmul.f32 %v696, %v720
        %v722 = vmin.f32 %v721, 1.0
        %v723 = vmax.f32 %v722, -1.0
        %v724 = vmul.f32 %v247, %v247
        %v725 = vmin.f32 16.0, %v724
        %v726 = vmul.f32 %v725, 2.1237322e-06
        %v727 = vadd.f32 %v726, 0.00028619796
        %v728 = vmul.f32 %v725, %v727
        %v729 = vadd.f32 %v728, 0.0036580483
        %v730 = vmul.f32 %v725, %v729
        %v731 = vadd.f32 %v730, 0.05243302
        %v732 = vmul.f32 %v725, %v731
        %v733 = vadd.f32 %v732, 0.18741608
        %v734 = vmul.f32 %v725, %v733
        %v735 = vadd.f32 %v734, 1.1283791
        %v736 = vmul.f32 %v247, %v735
        %v737 = vmul.f32 %v725, 3.8918573e-05
        %v738 = vadd.f32 %v737, 0.001143296
        %v739 = vmul.f32 %v725, %v738
        %v740 = vadd.f32 %v739, 0.014752088
        %v741 = vmul.f32 %v725, %v740
        %v742 = vadd.f32 %v741, 0.112945676
        %v743 = vmul.f32 %v725, %v742
        %v744 = vadd.f32 %v743, 0.4994258
        %v745 = vmul.f32 %v725, %v744
        %v746 = vadd.f32 %v745, 1.0
        %v747 = vrcp.pop %v746
        %v748 = vmul.f32 %v746, %v747
        %v749 = vsub.f32 1.0, %v748
        %v750 = vmul.f32 %v747, %v749
        %v751 = vadd.f32 %v747, %v750
        %vm752 = vweird.f32 %v746
        %vm753 = vweird.f32 %v747
        %vm754 = vmor %vm752, %vm753
        %v755 = vsel %vm754, %v747, %v751
        %v756 = vand.u32 2147483647, %v746
        %vm757 = vcmp.eq.f32.partialorder %v756, 8.507059e+37
        %v758 = vand.u32 %v746, 2147483648
        %v759 = vor.u32 1.1754944e-38, %v758
        %v760 = vsel %vm757, %v759, %v755
        %v761 = vmul.f32 %v736, %v760
        %v762 = vmin.f32 %v761, 1.0
        %v763 = vmax.f32 %v762, -1.0
        %v764 = vmul.f32 %v248, %v248
        %v765 = vmin.f32 16.0, %v764
        %v766 = vmul.f32 %v765, 2.1237322e-06
        %v767 = vadd.f32 %v766, 0.00028619796
        %v768 = vmul.f32 %v765, %v767
        %v769 = vadd.f32 %v768, 0.0036580483
        %v770 = vmul.f32 %v765, %v769
        %v771 = vadd.f32 %v770, 0.05243302
        %v772 = vmul.f32 %v765, %v771
        %v773 = vadd.f32 %v772, 0.18741608
        %v774 = vmul.f32 %v765, %v773
        %v775 = vadd.f32 %v774, 1.1283791
        %v776 = vmul.f32 %v248, %v775
        %v777 = vmul.f32 %v765, 3.8918573e-05
        %v778 = vadd.f32 %v777, 0.001143296
        %v779 = vmul.f32 %v765, %v778
        %v780 = vadd.f32 %v779, 0.014752088
        %v781 = vmul.f32 %v765, %v780
        %v782 = vadd.f32 %v781, 0.112945676
        %v783 = vmul.f32 %v765, %v782
        %v784 = vadd.f32 %v783, 0.4994258
        %v785 = vmul.f32 %v765, %v784
        %v786 = vadd.f32 %v785, 1.0
        %v787 = vrcp.pop %v786
        %v788 = vmul.f32 %v786, %v787
        %v789 = vsub.f32 1.0, %v788
        %v790 = vmul.f32 %v787, %v789
        %v791 = vadd.f32 %v787, %v790
        %vm792 = vweird.f32 %v786
        %vm793 = vweird.f32 %v787
        %vm794 = vmor %vm792, %vm793
        %v795 = vsel %vm794, %v787, %v791
        %v796 = vand.u32 2147483647, %v786
        %vm797 = vcmp.eq.f32.partialorder %v796, 8.507059e+37
        %v798 = vand.u32 %v786, 2147483648
        %v799 = vor.u32 1.1754944e-38, %v798
        %v800 = vsel %vm797, %v799, %v795
        %v801 = vmul.f32 %v776, %v800
        %v802 = vmin.f32 %v801, 1.0
        %v803 = vmax.f32 %v802, -1.0
        %v804 = vmul.f32 %v249, %v249
        %v805 = vmin.f32 16.0, %v804
        %v806 = vmul.f32 %v805, 2.1237322e-06
        %v807 = vadd.f32 %v806, 0.00028619796
        %v808 = vmul.f32 %v805, %v807
        %v809 = vadd.f32 %v808, 0.0036580483
        %v810 = vmul.f32 %v805, %v809
        %v811 = vadd.f32 %v810, 0.05243302
        %v812 = vmul.f32 %v805, %v811
        %v813 = vadd.f32 %v812, 0.18741608
        %v814 = vmul.f32 %v805, %v813
        %v815 = vadd.f32 %v814, 1.1283791
        %v816 = vmul.f32 %v249, %v815
        %v817 = vmul.f32 %v805, 3.8918573e-05
        %v818 = vadd.f32 %v817, 0.001143296
        %v819 = vmul.f32 %v805, %v818
        %v820 = vadd.f32 %v819, 0.014752088
        %v821 = vmul.f32 %v805, %v820
        %v822 = vadd.f32 %v821, 0.112945676
        %v823 = vmul.f32 %v805, %v822
        %v824 = vadd.f32 %v823, 0.4994258
        %v825 = vmul.f32 %v805, %v824
        %v826 = vadd.f32 %v825, 1.0
        %v827 = vrcp.pop %v826
        %v828 = vmul.f32 %v826, %v827
        %v829 = vsub.f32 1.0, %v828
        %v830 = vmul.f32 %v827, %v829
        %v831 = vadd.f32 %v827, %v830
        %vm832 = vweird.f32 %v826
        %vm833 = vweird.f32 %v827
        %vm834 = vmor %vm832, %vm833
        %v835 = vsel %vm834, %v827, %v831
        %v836 = vand.u32 2147483647, %v826
        %vm837 = vcmp.eq.f32.partialorder %v836, 8.507059e+37
        %v838 = vand.u32 %v826, 2147483648
        %v839 = vor.u32 1.1754944e-38, %v838
        %v840 = vsel %vm837, %v839, %v835
        %v841 = vmul.f32 %v816, %v840
        %v842 = vmin.f32 %v841, 1.0
        %v843 = vmax.f32 %v842, -1.0
        %v844 = vmul.f32 %v250, %v250
        %v845 = vmin.f32 16.0, %v844
        %v846 = vmul.f32 %v845, 2.1237322e-06
        %v847 = vadd.f32 %v846, 0.00028619796
        %v848 = vmul.f32 %v845, %v847
        %v849 = vadd.f32 %v848, 0.0036580483
        %v850 = vmul.f32 %v845, %v849
        %v851 = vadd.f32 %v850, 0.05243302
        %v852 = vmul.f32 %v845, %v851
        %v853 = vadd.f32 %v852, 0.18741608
        %v854 = vmul.f32 %v845, %v853
        %v855 = vadd.f32 %v854, 1.1283791
        %v856 = vmul.f32 %v250, %v855
        %v857 = vmul.f32 %v845, 3.8918573e-05
        %v858 = vadd.f32 %v857, 0.001143296
        %v859 = vmul.f32 %v845, %v858
        %v860 = vadd.f32 %v859, 0.014752088
        %v861 = vmul.f32 %v845, %v860
        %v862 = vadd.f32 %v861, 0.112945676
        %v863 = vmul.f32 %v845, %v862
        %v864 = vadd.f32 %v863, 0.4994258
        %v865 = vmul.f32 %v845, %v864
        %v866 = vadd.f32 %v865, 1.0
        %v867 = vrcp.pop %v866
        %v868 = vmul.f32 %v866, %v867
        %v869 = vsub.f32 1.0, %v868
        %v870 = vmul.f32 %v867, %v869
        %v871 = vadd.f32 %v867, %v870
        %vm872 = vweird.f32 %v866
        %vm873 = vweird.f32 %v867
        %vm874 = vmor %vm872, %vm873
        %v875 = vsel %vm874, %v867, %v871
        %v876 = vand.u32 2147483647, %v866
        %vm877 = vcmp.eq.f32.partialorder %v876, 8.507059e+37
        %v878 = vand.u32 %v866, 2147483648
        %v879 = vor.u32 1.1754944e-38, %v878
        %v880 = vsel %vm877, %v879, %v875
        %v881 = vmul.f32 %v856, %v880
        %v882 = vmin.f32 %v881, 1.0
        %v883 = vmax.f32 %v882, -1.0
        %v884 = vmul.f32 %v251, %v251
        %v885 = vmin.f32 16.0, %v884
        %v886 = vmul.f32 %v885, 2.1237322e-06
        %v887 = vadd.f32 %v886, 0.00028619796
        %v888 = vmul.f32 %v885, %v887
        %v889 = vadd.f32 %v888, 0.0036580483
        %v890 = vmul.f32 %v885, %v889
        %v891 = vadd.f32 %v890, 0.05243302
        %v892 = vmul.f32 %v885, %v891
        %v893 = vadd.f32 %v892, 0.18741608
        %v894 = vmul.f32 %v885, %v893
        %v895 = vadd.f32 %v894, 1.1283791
        %v896 = vmul.f32 %v251, %v895
        %v897 = vmul.f32 %v885, 3.8918573e-05
        %v898 = vadd.f32 %v897, 0.001143296
        %v899 = vmul.f32 %v885, %v898
        %v900 = vadd.f32 %v899, 0.014752088
        %v901 = vmul.f32 %v885, %v900
        %v902 = vadd.f32 %v901, 0.112945676
        %v903 = vmul.f32 %v885, %v902
        %v904 = vadd.f32 %v903, 0.4994258
        %v905 = vmul.f32 %v885, %v904
        %v906 = vadd.f32 %v905, 1.0
        %v907 = vrcp.pop %v906
        %v908 = vmul.f32 %v906, %v907
        %v909 = vsub.f32 1.0, %v908
        %v910 = vmul.f32 %v907, %v909
        %v911 = vadd.f32 %v907, %v910
        %vm912 = vweird.f32 %v906
        %vm913 = vweird.f32 %v907
        %vm914 = vmor %vm912, %vm913
        %v915 = vsel %vm914, %v907, %v911
        %v916 = vand.u32 2147483647, %v906
        %vm917 = vcmp.eq.f32.partialorder %v916, 8.507059e+37
        %v918 = vand.u32 %v906, 2147483648
        %v919 = vor.u32 1.1754944e-38, %v918
        %v920 = vsel %vm917, %v919, %v915
        %v921 = vmul.f32 %v896, %v920
        %v922 = vmin.f32 %v921, 1.0
        %v923 = vmax.f32 %v922, -1.0
        %v924 = vmul.f32 %v252, %v252
        %v925 = vmin.f32 16.0, %v924
        %v926 = vmul.f32 %v925, 2.1237322e-06
        %v927 = vadd.f32 %v926, 0.00028619796
        %v928 = vmul.f32 %v925, %v927
        %v929 = vadd.f32 %v928, 0.0036580483
        %v930 = vmul.f32 %v925, %v929
        %v931 = vadd.f32 %v930, 0.05243302
        %v932 = vmul.f32 %v925, %v931
        %v933 = vadd.f32 %v932, 0.18741608
        %v934 = vmul.f32 %v925, %v933
        %v935 = vadd.f32 %v934, 1.1283791
        %v936 = vmul.f32 %v252, %v935
        %v937 = vmul.f32 %v925, 3.8918573e-05
        %v938 = vadd.f32 %v937, 0.001143296
        %v939 = vmul.f32 %v925, %v938
        %v940 = vadd.f32 %v939, 0.014752088
        %v941 = vmul.f32 %v925, %v940
        %v942 = vadd.f32 %v941, 0.112945676
        %v943 = vmul.f32 %v925, %v942
        %v944 = vadd.f32 %v943, 0.4994258
        %v945 = vmul.f32 %v925, %v944
        %v946 = vadd.f32 %v945, 1.0
        %v947 = vrcp.pop %v946
        %v948 = vmul.f32 %v946, %v947
        %v949 = vsub.f32 1.0, %v948
        %v950 = vmul.f32 %v947, %v949
        %v951 = vadd.f32 %v947, %v950
        %vm952 = vweird.f32 %v946
        %vm953 = vweird.f32 %v947
        %vm954 = vmor %vm952, %vm953
        %v955 = vsel %vm954, %v947, %v951
        %v956 = vand.u32 2147483647, %v946
        %vm957 = vcmp.eq.f32.partialorder %v956, 8.507059e+37
        %v958 = vand.u32 %v946, 2147483648
        %v959 = vor.u32 1.1754944e-38, %v958
        %v960 = vsel %vm957, %v959, %v955
        %v961 = vmul.f32 %v936, %v960
        %v962 = vmin.f32 %v961, 1.0
        %v963 = vmax.f32 %v962, -1.0
        %v964 = vmul.f32 %v253, %v253
        %v965 = vmin.f32 16.0, %v964
        %v966 = vmul.f32 %v965, 2.1237322e-06
        %v967 = vadd.f32 %v966, 0.00028619796
        %v968 = vmul.f32 %v965, %v967
        %v969 = vadd.f32 %v968, 0.0036580483
        %v970 = vmul.f32 %v965, %v969
        %v971 = vadd.f32 %v970, 0.05243302
        %v972 = vmul.f32 %v965, %v971
        %v973 = vadd.f32 %v972, 0.18741608
        %v974 = vmul.f32 %v965, %v973
        %v975 = vadd.f32 %v974, 1.1283791
        %v976 = vmul.f32 %v253, %v975
        %v977 = vmul.f32 %v965, 3.8918573e-05
        %v978 = vadd.f32 %v977, 0.001143296
        %v979 = vmul.f32 %v965, %v978
        %v980 = vadd.f32 %v979, 0.014752088
        %v981 = vmul.f32 %v965, %v980
        %v982 = vadd.f32 %v981, 0.112945676
        %v983 = vmul.f32 %v965, %v982
        %v984 = vadd.f32 %v983, 0.4994258
        %v985 = vmul.f32 %v965, %v984
        %v986 = vadd.f32 %v985, 1.0
        %v987 = vrcp.pop %v986
        %v988 = vmul.f32 %v986, %v987
        %v989 = vsub.f32 1.0, %v988
        %v990 = vmul.f32 %v987, %v989
        %v991 = vadd.f32 %v987, %v990
        %vm992 = vweird.f32 %v986
        %vm993 = vweird.f32 %v987
        %vm994 = vmor %vm992, %vm993
        %v995 = vsel %vm994, %v987, %v991
        %v996 = vand.u32 2147483647, %v986
        %vm997 = vcmp.eq.f32.partialorder %v996, 8.507059e+37
        %v998 = vand.u32 %v986, 2147483648
        %v999 = vor.u32 1.1754944e-38, %v998
        %v1000 = vsel %vm997, %v999, %v995
        %v1001 = vmul.f32 %v976, %v1000
        %v1002 = vmin.f32 %v1001, 1.0
        %v1003 = vmax.f32 %v1002, -1.0
        %v1004 = vmul.f32 %v254, %v254
        %v1005 = vmin.f32 16.0, %v1004
        %v1006 = vmul.f32 %v1005, 2.1237322e-06
        %v1007 = vadd.f32 %v1006, 0.00028619796
        %v1008 = vmul.f32 %v1005, %v1007
        %v1009 = vadd.f32 %v1008, 0.0036580483
        %v1010 = vmul.f32 %v1005, %v1009
        %v1011 = vadd.f32 %v1010, 0.05243302
        %v1012 = vmul.f32 %v1005, %v1011
        %v1013 = vadd.f32 %v1012, 0.18741608
        %v1014 = vmul.f32 %v1005, %v1013
        %v1015 = vadd.f32 %v1014, 1.1283791
        %v1016 = vmul.f32 %v254, %v1015
        %v1017 = vmul.f32 %v1005, 3.8918573e-05
        %v1018 = vadd.f32 %v1017, 0.001143296
        %v1019 = vmul.f32 %v1005, %v1018
        %v1020 = vadd.f32 %v1019, 0.014752088
        %v1021 = vmul.f32 %v1005, %v1020
        %v1022 = vadd.f32 %v1021, 0.112945676
        %v1023 = vmul.f32 %v1005, %v1022
        %v1024 = vadd.f32 %v1023, 0.4994258
        %v1025 = vmul.f32 %v1005, %v1024
        %v1026 = vadd.f32 %v1025, 1.0
        %v1027 = vrcp.pop %v1026
        %v1028 = vmul.f32 %v1026, %v1027
        %v1029 = vsub.f32 1.0, %v1028
        %v1030 = vmul.f32 %v1027, %v1029
        %v1031 = vadd.f32 %v1027, %v1030
        %vm1032 = vweird.f32 %v1026
        %vm1033 = vweird.f32 %v1027
        %vm1034 = vmor %vm1032, %vm1033
        %v1035 = vsel %vm1034, %v1027, %v1031
        %v1036 = vand.u32 2147483647, %v1026
        %vm1037 = vcmp.eq.f32.partialorder %v1036, 8.507059e+37
        %v1038 = vand.u32 %v1026, 2147483648
        %v1039 = vor.u32 1.1754944e-38, %v1038
        %v1040 = vsel %vm1037, %v1039, %v1035
        %v1041 = vmul.f32 %v1016, %v1040
        %v1042 = vmin.f32 %v1041, 1.0
        %v1043 = vmax.f32 %v1042, -1.0
        %v1044 = vmul.f32 %v255, %v255
        %v1045 = vmin.f32 16.0, %v1044
        %v1046 = vmul.f32 %v1045, 2.1237322e-06
        %v1047 = vadd.f32 %v1046, 0.00028619796
        %v1048 = vmul.f32 %v1045, %v1047
        %v1049 = vadd.f32 %v1048, 0.0036580483
        %v1050 = vmul.f32 %v1045, %v1049
        %v1051 = vadd.f32 %v1050, 0.05243302
        %v1052 = vmul.f32 %v1045, %v1051
        %v1053 = vadd.f32 %v1052, 0.18741608
        %v1054 = vmul.f32 %v1045, %v1053
        %v1055 = vadd.f32 %v1054, 1.1283791
        %v1056 = vmul.f32 %v255, %v1055
        %v1057 = vmul.f32 %v1045, 3.8918573e-05
        %v1058 = vadd.f32 %v1057, 0.001143296
        %v1059 = vmul.f32 %v1045, %v1058
        %v1060 = vadd.f32 %v1059, 0.014752088
        %v1061 = vmul.f32 %v1045, %v1060
        %v1062 = vadd.f32 %v1061, 0.112945676
        %v1063 = vmul.f32 %v1045, %v1062
        %v1064 = vadd.f32 %v1063, 0.4994258
        %v1065 = vmul.f32 %v1045, %v1064
        %v1066 = vadd.f32 %v1065, 1.0
        %v1067 = vrcp.pop %v1066
        %v1068 = vmul.f32 %v1066, %v1067
        %v1069 = vsub.f32 1.0, %v1068
        %v1070 = vmul.f32 %v1067, %v1069
        %v1071 = vadd.f32 %v1067, %v1070
        %vm1072 = vweird.f32 %v1066
        %vm1073 = vweird.f32 %v1067
        %vm1074 = vmor %vm1072, %vm1073
        %v1075 = vsel %vm1074, %v1067, %v1071
        %v1076 = vand.u32 2147483647, %v1066
        %vm1077 = vcmp.eq.f32.partialorder %v1076, 8.507059e+37
        %v1078 = vand.u32 %v1066, 2147483648
        %v1079 = vor.u32 1.1754944e-38, %v1078
        %v1080 = vsel %vm1077, %v1079, %v1075
        %v1081 = vmul.f32 %v1056, %v1080
        %v1082 = vmin.f32 %v1081, 1.0
        %v1083 = vmax.f32 %v1082, -1.0
        %v1084 = vmul.f32 %v256, %v256
        %v1085 = vmin.f32 16.0, %v1084
        %v1086 = vmul.f32 %v1085, 2.1237322e-06
        %v1087 = vadd.f32 %v1086, 0.00028619796
        %v1088 = vmul.f32 %v1085, %v1087
        %v1089 = vadd.f32 %v1088, 0.0036580483
        %v1090 = vmul.f32 %v1085, %v1089
        %v1091 = vadd.f32 %v1090, 0.05243302
        %v1092 = vmul.f32 %v1085, %v1091
        %v1093 = vadd.f32 %v1092, 0.18741608
        %v1094 = vmul.f32 %v1085, %v1093
        %v1095 = vadd.f32 %v1094, 1.1283791
        %v1096 = vmul.f32 %v256, %v1095
        %v1097 = vmul.f32 %v1085, 3.8918573e-05
        %v1098 = vadd.f32 %v1097, 0.001143296
        %v1099 = vmul.f32 %v1085, %v1098
        %v1100 = vadd.f32 %v1099, 0.014752088
        %v1101 = vmul.f32 %v1085, %v1100
        %v1102 = vadd.f32 %v1101, 0.112945676
        %v1103 = vmul.f32 %v1085, %v1102
        %v1104 = vadd.f32 %v1103, 0.4994258
        %v1105 = vmul.f32 %v1085, %v1104
        %v1106 = vadd.f32 %v1105, 1.0
        %v1107 = vrcp.pop %v1106
        %v1108 = vmul.f32 %v1106, %v1107
        %v1109 = vsub.f32 1.0, %v1108
        %v1110 = vmul.f32 %v1107, %v1109
        %v1111 = vadd.f32 %v1107, %v1110
        %vm1112 = vweird.f32 %v1106
        %vm1113 = vweird.f32 %v1107
        %vm1114 = vmor %vm1112, %vm1113
        %v1115 = vsel %vm1114, %v1107, %v1111
        %v1116 = vand.u32 2147483647, %v1106
        %vm1117 = vcmp.eq.f32.partialorder %v1116, 8.507059e+37
        %v1118 = vand.u32 %v1106, 2147483648
        %v1119 = vor.u32 1.1754944e-38, %v1118
        %v1120 = vsel %vm1117, %v1119, %v1115
        %v1121 = vmul.f32 %v1096, %v1120
        %v1122 = vmin.f32 %v1121, 1.0
        %v1123 = vmax.f32 %v1122, -1.0
        %v1124 = vmul.f32 %v257, %v257
        %v1125 = vmin.f32 16.0, %v1124
        %v1126 = vmul.f32 %v1125, 2.1237322e-06
        %v1127 = vadd.f32 %v1126, 0.00028619796
        %v1128 = vmul.f32 %v1125, %v1127
        %v1129 = vadd.f32 %v1128, 0.0036580483
        %v1130 = vmul.f32 %v1125, %v1129
        %v1131 = vadd.f32 %v1130, 0.05243302
        %v1132 = vmul.f32 %v1125, %v1131
        %v1133 = vadd.f32 %v1132, 0.18741608
        %v1134 = vmul.f32 %v1125, %v1133
        %v1135 = vadd.f32 %v1134, 1.1283791
        %v1136 = vmul.f32 %v257, %v1135
        %v1137 = vmul.f32 %v1125, 3.8918573e-05
        %v1138 = vadd.f32 %v1137, 0.001143296
        %v1139 = vmul.f32 %v1125, %v1138
        %v1140 = vadd.f32 %v1139, 0.014752088
        %v1141 = vmul.f32 %v1125, %v1140
        %v1142 = vadd.f32 %v1141, 0.112945676
        %v1143 = vmul.f32 %v1125, %v1142
        %v1144 = vadd.f32 %v1143, 0.4994258
        %v1145 = vmul.f32 %v1125, %v1144
        %v1146 = vadd.f32 %v1145, 1.0
        %v1147 = vrcp.pop %v1146
        %v1148 = vmul.f32 %v1146, %v1147
        %v1149 = vsub.f32 1.0, %v1148
        %v1150 = vmul.f32 %v1147, %v1149
        %v1151 = vadd.f32 %v1147, %v1150
        %vm1152 = vweird.f32 %v1146
        %vm1153 = vweird.f32 %v1147
        %vm1154 = vmor %vm1152, %vm1153
        %v1155 = vsel %vm1154, %v1147, %v1151
        %v1156 = vand.u32 2147483647, %v1146
        %vm1157 = vcmp.eq.f32.partialorder %v1156, 8.507059e+37
        %v1158 = vand.u32 %v1146, 2147483648
        %v1159 = vor.u32 1.1754944e-38, %v1158
        %v1160 = vsel %vm1157, %v1159, %v1155
        %v1161 = vmul.f32 %v1136, %v1160
        %v1162 = vmin.f32 %v1161, 1.0
        %v1163 = vmax.f32 %v1162, -1.0
        %v1164 = vmul.f32 %v258, %v258
        %v1165 = vmin.f32 16.0, %v1164
        %v1166 = vmul.f32 %v1165, 2.1237322e-06
        %v1167 = vadd.f32 %v1166, 0.00028619796
        %v1168 = vmul.f32 %v1165, %v1167
        %v1169 = vadd.f32 %v1168, 0.0036580483
        %v1170 = vmul.f32 %v1165, %v1169
        %v1171 = vadd.f32 %v1170, 0.05243302
        %v1172 = vmul.f32 %v1165, %v1171
        %v1173 = vadd.f32 %v1172, 0.18741608
        %v1174 = vmul.f32 %v1165, %v1173
        %v1175 = vadd.f32 %v1174, 1.1283791
        %v1176 = vmul.f32 %v258, %v1175
        %v1177 = vmul.f32 %v1165, 3.8918573e-05
        %v1178 = vadd.f32 %v1177, 0.001143296
        %v1179 = vmul.f32 %v1165, %v1178
        %v1180 = vadd.f32 %v1179, 0.014752088
        %v1181 = vmul.f32 %v1165, %v1180
        %v1182 = vadd.f32 %v1181, 0.112945676
        %v1183 = vmul.f32 %v1165, %v1182
        %v1184 = vadd.f32 %v1183, 0.4994258
        %v1185 = vmul.f32 %v1165, %v1184
        %v1186 = vadd.f32 %v1185, 1.0
        %v1187 = vrcp.pop %v1186
        %v1188 = vmul.f32 %v1186, %v1187
        %v1189 = vsub.f32 1.0, %v1188
        %v1190 = vmul.f32 %v1187, %v1189
        %v1191 = vadd.f32 %v1187, %v1190
        %vm1192 = vweird.f32 %v1186
        %vm1193 = vweird.f32 %v1187
        %vm1194 = vmor %vm1192, %vm1193
        %v1195 = vsel %vm1194, %v1187, %v1191
        %v1196 = vand.u32 2147483647, %v1186
        %vm1197 = vcmp.eq.f32.partialorder %v1196, 8.507059e+37
        %v1198 = vand.u32 %v1186, 2147483648
        %v1199 = vor.u32 1.1754944e-38, %v1198
        %v1200 = vsel %vm1197, %v1199, %v1195
        %v1201 = vmul.f32 %v1176, %v1200
        %v1202 = vmin.f32 %v1201, 1.0
        %v1203 = vmax.f32 %v1202, -1.0
        %v1204 = vmul.f32 %v259, %v259
        %v1205 = vmin.f32 16.0, %v1204
        %v1206 = vmul.f32 %v1205, 2.1237322e-06
        %v1207 = vadd.f32 %v1206, 0.00028619796
        %v1208 = vmul.f32 %v1205, %v1207
        %v1209 = vadd.f32 %v1208, 0.0036580483
        %v1210 = vmul.f32 %v1205, %v1209
        %v1211 = vadd.f32 %v1210, 0.05243302
        %v1212 = vmul.f32 %v1205, %v1211
        %v1213 = vadd.f32 %v1212, 0.18741608
        %v1214 = vmul.f32 %v1205, %v1213
        %v1215 = vadd.f32 %v1214, 1.1283791
        %v1216 = vmul.f32 %v259, %v1215
        %v1217 = vmul.f32 %v1205, 3.8918573e-05
        %v1218 = vadd.f32 %v1217, 0.001143296
        %v1219 = vmul.f32 %v1205, %v1218
        %v1220 = vadd.f32 %v1219, 0.014752088
        %v1221 = vmul.f32 %v1205, %v1220
        %v1222 = vadd.f32 %v1221, 0.112945676
        %v1223 = vmul.f32 %v1205, %v1222
        %v1224 = vadd.f32 %v1223, 0.4994258
        %v1225 = vmul.f32 %v1205, %v1224
        %v1226 = vadd.f32 %v1225, 1.0
        %v1227 = vrcp.pop %v1226
        %v1228 = vmul.f32 %v1226, %v1227
        %v1229 = vsub.f32 1.0, %v1228
        %v1230 = vmul.f32 %v1227, %v1229
        %v1231 = vadd.f32 %v1227, %v1230
        %vm1232 = vweird.f32 %v1226
        %vm1233 = vweird.f32 %v1227
        %vm1234 = vmor %vm1232, %vm1233
        %v1235 = vsel %vm1234, %v1227, %v1231
        %v1236 = vand.u32 2147483647, %v1226
        %vm1237 = vcmp.eq.f32.partialorder %v1236, 8.507059e+37
        %v1238 = vand.u32 %v1226, 2147483648
        %v1239 = vor.u32 1.1754944e-38, %v1238
        %v1240 = vsel %vm1237, %v1239, %v1235
        %v1241 = vmul.f32 %v1216, %v1240
        %v1242 = vmin.f32 %v1241, 1.0
        %v1243 = vmax.f32 %v1242, -1.0
        %v1244 = vmul.f32 %v260, %v260
        %v1245 = vmin.f32 16.0, %v1244
        %v1246 = vmul.f32 %v1245, 2.1237322e-06
        %v1247 = vadd.f32 %v1246, 0.00028619796
        %v1248 = vmul.f32 %v1245, %v1247
        %v1249 = vadd.f32 %v1248, 0.0036580483
        %v1250 = vmul.f32 %v1245, %v1249
        %v1251 = vadd.f32 %v1250, 0.05243302
        %v1252 = vmul.f32 %v1245, %v1251
        %v1253 = vadd.f32 %v1252, 0.18741608
        %v1254 = vmul.f32 %v1245, %v1253
        %v1255 = vadd.f32 %v1254, 1.1283791
        %v1256 = vmul.f32 %v260, %v1255
        %v1257 = vmul.f32 %v1245, 3.8918573e-05
        %v1258 = vadd.f32 %v1257, 0.001143296
        %v1259 = vmul.f32 %v1245, %v1258
        %v1260 = vadd.f32 %v1259, 0.014752088
        %v1261 = vmul.f32 %v1245, %v1260
        %v1262 = vadd.f32 %v1261, 0.112945676
        %v1263 = vmul.f32 %v1245, %v1262
        %v1264 = vadd.f32 %v1263, 0.4994258
        %v1265 = vmul.f32 %v1245, %v1264
        %v1266 = vadd.f32 %v1265, 1.0
        %v1267 = vrcp.pop %v1266
        %v1268 = vmul.f32 %v1266, %v1267
        %v1269 = vsub.f32 1.0, %v1268
        %v1270 = vmul.f32 %v1267, %v1269
        %v1271 = vadd.f32 %v1267, %v1270
        %vm1272 = vweird.f32 %v1266
        %vm1273 = vweird.f32 %v1267
        %vm1274 = vmor %vm1272, %vm1273
        %v1275 = vsel %vm1274, %v1267, %v1271
        %v1276 = vand.u32 2147483647, %v1266
        %vm1277 = vcmp.eq.f32.partialorder %v1276, 8.507059e+37
        %v1278 = vand.u32 %v1266, 2147483648
        %v1279 = vor.u32 1.1754944e-38, %v1278
        %v1280 = vsel %vm1277, %v1279, %v1275
        %v1281 = vmul.f32 %v1256, %v1280
        %v1282 = vmin.f32 %v1281, 1.0
        %v1283 = vmax.f32 %v1282, -1.0
        %v1284 = vmul.f32 %v261, %v261
        %v1285 = vmin.f32 16.0, %v1284
        %v1286 = vmul.f32 %v1285, 2.1237322e-06
        %v1287 = vadd.f32 %v1286, 0.00028619796
        %v1288 = vmul.f32 %v1285, %v1287
        %v1289 = vadd.f32 %v1288, 0.0036580483
        %v1290 = vmul.f32 %v1285, %v1289
        %v1291 = vadd.f32 %v1290, 0.05243302
        %v1292 = vmul.f32 %v1285, %v1291
        %v1293 = vadd.f32 %v1292, 0.18741608
        %v1294 = vmul.f32 %v1285, %v1293
        %v1295 = vadd.f32 %v1294, 1.1283791
        %v1296 = vmul.f32 %v261, %v1295
        %v1297 = vmul.f32 %v1285, 3.8918573e-05
        %v1298 = vadd.f32 %v1297, 0.001143296
        %v1299 = vmul.f32 %v1285, %v1298
        %v1300 = vadd.f32 %v1299, 0.014752088
        %v1301 = vmul.f32 %v1285, %v1300
        %v1302 = vadd.f32 %v1301, 0.112945676
        %v1303 = vmul.f32 %v1285, %v1302
        %v1304 = vadd.f32 %v1303, 0.4994258
        %v1305 = vmul.f32 %v1285, %v1304
        %v1306 = vadd.f32 %v1305, 1.0
        %v1307 = vrcp.pop %v1306
        %v1308 = vmul.f32 %v1306, %v1307
        %v1309 = vsub.f32 1.0, %v1308
        %v1310 = vmul.f32 %v1307, %v1309
        %v1311 = vadd.f32 %v1307, %v1310
        %vm1312 = vweird.f32 %v1306
        %vm1313 = vweird.f32 %v1307
        %vm1314 = vmor %vm1312, %vm1313
        %v1315 = vsel %vm1314, %v1307, %v1311
        %v1316 = vand.u32 2147483647, %v1306
        %vm1317 = vcmp.eq.f32.partialorder %v1316, 8.507059e+37
        %v1318 = vand.u32 %v1306, 2147483648
        %v1319 = vor.u32 1.1754944e-38, %v1318
        %v1320 = vsel %vm1317, %v1319, %v1315
        %v1321 = vmul.f32 %v1296, %v1320
        %v1322 = vmin.f32 %v1321, 1.0
        %v1323 = vmax.f32 %v1322, -1.0
        %v1324 = vmul.f32 %v262, %v262
        %v1325 = vmin.f32 16.0, %v1324
        %v1326 = vmul.f32 %v1325, 2.1237322e-06
        %v1327 = vadd.f32 %v1326, 0.00028619796
        %v1328 = vmul.f32 %v1325, %v1327
        %v1329 = vadd.f32 %v1328, 0.0036580483
        %v1330 = vmul.f32 %v1325, %v1329
        %v1331 = vadd.f32 %v1330, 0.05243302
        %v1332 = vmul.f32 %v1325, %v1331
        %v1333 = vadd.f32 %v1332, 0.18741608
        %v1334 = vmul.f32 %v1325, %v1333
        %v1335 = vadd.f32 %v1334, 1.1283791
        %v1336 = vmul.f32 %v262, %v1335
        %v1337 = vmul.f32 %v1325, 3.8918573e-05
        %v1338 = vadd.f32 %v1337, 0.001143296
        %v1339 = vmul.f32 %v1325, %v1338
        %v1340 = vadd.f32 %v1339, 0.014752088
        %v1341 = vmul.f32 %v1325, %v1340
        %v1342 = vadd.f32 %v1341, 0.112945676
        %v1343 = vmul.f32 %v1325, %v1342
        %v1344 = vadd.f32 %v1343, 0.4994258
        %v1345 = vmul.f32 %v1325, %v1344
        %v1346 = vadd.f32 %v1345, 1.0
        %v1347 = vrcp.pop %v1346
        %v1348 = vmul.f32 %v1346, %v1347
        %v1349 = vsub.f32 1.0, %v1348
        %v1350 = vmul.f32 %v1347, %v1349
        %v1351 = vadd.f32 %v1347, %v1350
        %vm1352 = vweird.f32 %v1346
        %vm1353 = vweird.f32 %v1347
        %vm1354 = vmor %vm1352, %vm1353
        %v1355 = vsel %vm1354, %v1347, %v1351
        %v1356 = vand.u32 2147483647, %v1346
        %vm1357 = vcmp.eq.f32.partialorder %v1356, 8.507059e+37
        %v1358 = vand.u32 %v1346, 2147483648
        %v1359 = vor.u32 1.1754944e-38, %v1358
        %v1360 = vsel %vm1357, %v1359, %v1355
        %v1361 = vmul.f32 %v1336, %v1360
        %v1362 = vmin.f32 %v1361, 1.0
        %v1363 = vmax.f32 %v1362, -1.0
        %v1364 = vmul.f32 %v263, %v263
        %v1365 = vmin.f32 16.0, %v1364
        %v1366 = vmul.f32 %v1365, 2.1237322e-06
        %v1367 = vadd.f32 %v1366, 0.00028619796
        %v1368 = vmul.f32 %v1365, %v1367
        %v1369 = vadd.f32 %v1368, 0.0036580483
        %v1370 = vmul.f32 %v1365, %v1369
        %v1371 = vadd.f32 %v1370, 0.05243302
        %v1372 = vmul.f32 %v1365, %v1371
        %v1373 = vadd.f32 %v1372, 0.18741608
        %v1374 = vmul.f32 %v1365, %v1373
        %v1375 = vadd.f32 %v1374, 1.1283791
        %v1376 = vmul.f32 %v263, %v1375
        %v1377 = vmul.f32 %v1365, 3.8918573e-05
        %v1378 = vadd.f32 %v1377, 0.001143296
        %v1379 = vmul.f32 %v1365, %v1378
        %v1380 = vadd.f32 %v1379, 0.014752088
        %v1381 = vmul.f32 %v1365, %v1380
        %v1382 = vadd.f32 %v1381, 0.112945676
        %v1383 = vmul.f32 %v1365, %v1382
        %v1384 = vadd.f32 %v1383, 0.4994258
        %v1385 = vmul.f32 %v1365, %v1384
        %v1386 = vadd.f32 %v1385, 1.0
        %v1387 = vrcp.pop %v1386
        %v1388 = vmul.f32 %v1386, %v1387
        %v1389 = vsub.f32 1.0, %v1388
        %v1390 = vmul.f32 %v1387, %v1389
        %v1391 = vadd.f32 %v1387, %v1390
        %vm1392 = vweird.f32 %v1386
        %vm1393 = vweird.f32 %v1387
        %vm1394 = vmor %vm1392, %vm1393
        %v1395 = vsel %vm1394, %v1387, %v1391
        %v1396 = vand.u32 2147483647, %v1386
        %vm1397 = vcmp.eq.f32.partialorder %v1396, 8.507059e+37
        %v1398 = vand.u32 %v1386, 2147483648
        %v1399 = vor.u32 1.1754944e-38, %v1398
        %v1400 = vsel %vm1397, %v1399, %v1395
        %v1401 = vmul.f32 %v1376, %v1400
        %v1402 = vmin.f32 %v1401, 1.0
        %v1403 = vmax.f32 %v1402, -1.0
        %v1404 = vmul.f32 %v264, %v264
        %v1405 = vmin.f32 16.0, %v1404
        %v1406 = vmul.f32 %v1405, 2.1237322e-06
        %v1407 = vadd.f32 %v1406, 0.00028619796
        %v1408 = vmul.f32 %v1405, %v1407
        %v1409 = vadd.f32 %v1408, 0.0036580483
        %v1410 = vmul.f32 %v1405, %v1409
        %v1411 = vadd.f32 %v1410, 0.05243302
        %v1412 = vmul.f32 %v1405, %v1411
        %v1413 = vadd.f32 %v1412, 0.18741608
        %v1414 = vmul.f32 %v1405, %v1413
        %v1415 = vadd.f32 %v1414, 1.1283791
        %v1416 = vmul.f32 %v264, %v1415
        %v1417 = vmul.f32 %v1405, 3.8918573e-05
        %v1418 = vadd.f32 %v1417, 0.001143296
        %v1419 = vmul.f32 %v1405, %v1418
        %v1420 = vadd.f32 %v1419, 0.014752088
        %v1421 = vmul.f32 %v1405, %v1420
        %v1422 = vadd.f32 %v1421, 0.112945676
        %v1423 = vmul.f32 %v1405, %v1422
        %v1424 = vadd.f32 %v1423, 0.4994258
        %v1425 = vmul.f32 %v1405, %v1424
        %v1426 = vadd.f32 %v1425, 1.0
        %v1427 = vrcp.pop %v1426
        %v1428 = vmul.f32 %v1426, %v1427
        %v1429 = vsub.f32 1.0, %v1428
        %v1430 = vmul.f32 %v1427, %v1429
        %v1431 = vadd.f32 %v1427, %v1430
        %vm1432 = vweird.f32 %v1426
        %vm1433 = vweird.f32 %v1427
        %vm1434 = vmor %vm1432, %vm1433
        %v1435 = vsel %vm1434, %v1427, %v1431
        %v1436 = vand.u32 2147483647, %v1426
        %vm1437 = vcmp.eq.f32.partialorder %v1436, 8.507059e+37
        %v1438 = vand.u32 %v1426, 2147483648
        %v1439 = vor.u32 1.1754944e-38, %v1438
        %v1440 = vsel %vm1437, %v1439, %v1435
        %v1441 = vmul.f32 %v1416, %v1440
        %v1442 = vmin.f32 %v1441, 1.0
        %v1443 = vmax.f32 %v1442, -1.0
        %v1444 = vmul.f32 %v265, %v265
        %v1445 = vmin.f32 16.0, %v1444
        %v1446 = vmul.f32 %v1445, 2.1237322e-06
        %v1447 = vadd.f32 %v1446, 0.00028619796
        %v1448 = vmul.f32 %v1445, %v1447
        %v1449 = vadd.f32 %v1448, 0.0036580483
        %v1450 = vmul.f32 %v1445, %v1449
        %v1451 = vadd.f32 %v1450, 0.05243302
        %v1452 = vmul.f32 %v1445, %v1451
        %v1453 = vadd.f32 %v1452, 0.18741608
        %v1454 = vmul.f32 %v1445, %v1453
        %v1455 = vadd.f32 %v1454, 1.1283791
        %v1456 = vmul.f32 %v265, %v1455
        %v1457 = vmul.f32 %v1445, 3.8918573e-05
        %v1458 = vadd.f32 %v1457, 0.001143296
        %v1459 = vmul.f32 %v1445, %v1458
        %v1460 = vadd.f32 %v1459, 0.014752088
        %v1461 = vmul.f32 %v1445, %v1460
        %v1462 = vadd.f32 %v1461, 0.112945676
        %v1463 = vmul.f32 %v1445, %v1462
        %v1464 = vadd.f32 %v1463, 0.4994258
        %v1465 = vmul.f32 %v1445, %v1464
        %v1466 = vadd.f32 %v1465, 1.0
        %v1467 = vrcp.pop %v1466
        %v1468 = vmul.f32 %v1466, %v1467
        %v1469 = vsub.f32 1.0, %v1468
        %v1470 = vmul.f32 %v1467, %v1469
        %v1471 = vadd.f32 %v1467, %v1470
        %vm1472 = vweird.f32 %v1466
        %vm1473 = vweird.f32 %v1467
        %vm1474 = vmor %vm1472, %vm1473
        %v1475 = vsel %vm1474, %v1467, %v1471
        %v1476 = vand.u32 2147483647, %v1466
        %vm1477 = vcmp.eq.f32.partialorder %v1476, 8.507059e+37
        %v1478 = vand.u32 %v1466, 2147483648
        %v1479 = vor.u32 1.1754944e-38, %v1478
        %v1480 = vsel %vm1477, %v1479, %v1475
        %v1481 = vmul.f32 %v1456, %v1480
        %v1482 = vmin.f32 %v1481, 1.0
        %v1483 = vmax.f32 %v1482, -1.0
        %v1484 = vmul.f32 %v266, %v266
        %v1485 = vmin.f32 16.0, %v1484
        %v1486 = vmul.f32 %v1485, 2.1237322e-06
        %v1487 = vadd.f32 %v1486, 0.00028619796
        %v1488 = vmul.f32 %v1485, %v1487
        %v1489 = vadd.f32 %v1488, 0.0036580483
        %v1490 = vmul.f32 %v1485, %v1489
        %v1491 = vadd.f32 %v1490, 0.05243302
        %v1492 = vmul.f32 %v1485, %v1491
        %v1493 = vadd.f32 %v1492, 0.18741608
        %v1494 = vmul.f32 %v1485, %v1493
        %v1495 = vadd.f32 %v1494, 1.1283791
        %v1496 = vmul.f32 %v266, %v1495
        %v1497 = vmul.f32 %v1485, 3.8918573e-05
        %v1498 = vadd.f32 %v1497, 0.001143296
        %v1499 = vmul.f32 %v1485, %v1498
        %v1500 = vadd.f32 %v1499, 0.014752088
        %v1501 = vmul.f32 %v1485, %v1500
        %v1502 = vadd.f32 %v1501, 0.112945676
        %v1503 = vmul.f32 %v1485, %v1502
        %v1504 = vadd.f32 %v1503, 0.4994258
        %v1505 = vmul.f32 %v1485, %v1504
        %v1506 = vadd.f32 %v1505, 1.0
        %v1507 = vrcp.pop %v1506
        %v1508 = vmul.f32 %v1506, %v1507
        %v1509 = vsub.f32 1.0, %v1508
        %v1510 = vmul.f32 %v1507, %v1509
        %v1511 = vadd.f32 %v1507, %v1510
        %vm1512 = vweird.f32 %v1506
        %vm1513 = vweird.f32 %v1507
        %vm1514 = vmor %vm1512, %vm1513
        %v1515 = vsel %vm1514, %v1507, %v1511
        %v1516 = vand.u32 2147483647, %v1506
        %vm1517 = vcmp.eq.f32.partialorder %v1516, 8.507059e+37
        %v1518 = vand.u32 %v1506, 2147483648
        %v1519 = vor.u32 1.1754944e-38, %v1518
        %v1520 = vsel %vm1517, %v1519, %v1515
        %v1521 = vmul.f32 %v1496, %v1520
        %v1522 = vmin.f32 %v1521, 1.0
        %v1523 = vmax.f32 %v1522, -1.0
        %v1524 = vmul.f32 %v267, %v267
        %v1525 = vmin.f32 16.0, %v1524
        %v1526 = vmul.f32 %v1525, 2.1237322e-06
        %v1527 = vadd.f32 %v1526, 0.00028619796
        %v1528 = vmul.f32 %v1525, %v1527
        %v1529 = vadd.f32 %v1528, 0.0036580483
        %v1530 = vmul.f32 %v1525, %v1529
        %v1531 = vadd.f32 %v1530, 0.05243302
        %v1532 = vmul.f32 %v1525, %v1531
        %v1533 = vadd.f32 %v1532, 0.18741608
        %v1534 = vmul.f32 %v1525, %v1533
        %v1535 = vadd.f32 %v1534, 1.1283791
        %v1536 = vmul.f32 %v267, %v1535
        %v1537 = vmul.f32 %v1525, 3.8918573e-05
        %v1538 = vadd.f32 %v1537, 0.001143296
        %v1539 = vmul.f32 %v1525, %v1538
        %v1540 = vadd.f32 %v1539, 0.014752088
        %v1541 = vmul.f32 %v1525, %v1540
        %v1542 = vadd.f32 %v1541, 0.112945676
        %v1543 = vmul.f32 %v1525, %v1542
        %v1544 = vadd.f32 %v1543, 0.4994258
        %v1545 = vmul.f32 %v1525, %v1544
        %v1546 = vadd.f32 %v1545, 1.0
        %v1547 = vrcp.pop %v1546
        %v1548 = vmul.f32 %v1546, %v1547
        %v1549 = vsub.f32 1.0, %v1548
        %v1550 = vmul.f32 %v1547, %v1549
        %v1551 = vadd.f32 %v1547, %v1550
        %vm1552 = vweird.f32 %v1546
        %vm1553 = vweird.f32 %v1547
        %vm1554 = vmor %vm1552, %vm1553
        %v1555 = vsel %vm1554, %v1547, %v1551
        %v1556 = vand.u32 2147483647, %v1546
        %vm1557 = vcmp.eq.f32.partialorder %v1556, 8.507059e+37
        %v1558 = vand.u32 %v1546, 2147483648
        %v1559 = vor.u32 1.1754944e-38, %v1558
        %v1560 = vsel %vm1557, %v1559, %v1555
        %v1561 = vmul.f32 %v1536, %v1560
        %v1562 = vmin.f32 %v1561, 1.0
        %v1563 = vmax.f32 %v1562, -1.0
        %v1564 = vmul.f32 %v268, %v268
        %v1565 = vmin.f32 16.0, %v1564
        %v1566 = vmul.f32 %v1565, 2.1237322e-06
        %v1567 = vadd.f32 %v1566, 0.00028619796
        %v1568 = vmul.f32 %v1565, %v1567
        %v1569 = vadd.f32 %v1568, 0.0036580483
        %v1570 = vmul.f32 %v1565, %v1569
        %v1571 = vadd.f32 %v1570, 0.05243302
        %v1572 = vmul.f32 %v1565, %v1571
        %v1573 = vadd.f32 %v1572, 0.18741608
        %v1574 = vmul.f32 %v1565, %v1573
        %v1575 = vadd.f32 %v1574, 1.1283791
        %v1576 = vmul.f32 %v268, %v1575
        %v1577 = vmul.f32 %v1565, 3.8918573e-05
        %v1578 = vadd.f32 %v1577, 0.001143296
        %v1579 = vmul.f32 %v1565, %v1578
        %v1580 = vadd.f32 %v1579, 0.014752088
        %v1581 = vmul.f32 %v1565, %v1580
        %v1582 = vadd.f32 %v1581, 0.112945676
        %v1583 = vmul.f32 %v1565, %v1582
        %v1584 = vadd.f32 %v1583, 0.4994258
        %v1585 = vmul.f32 %v1565, %v1584
        %v1586 = vadd.f32 %v1585, 1.0
        %v1587 = vrcp.pop %v1586
        %v1588 = vmul.f32 %v1586, %v1587
        %v1589 = vsub.f32 1.0, %v1588
        %v1590 = vmul.f32 %v1587, %v1589
        %v1591 = vadd.f32 %v1587, %v1590
        %vm1592 = vweird.f32 %v1586
        %vm1593 = vweird.f32 %v1587
        %vm1594 = vmor %vm1592, %vm1593
        %v1595 = vsel %vm1594, %v1587, %v1591
        %v1596 = vand.u32 2147483647, %v1586
        %vm1597 = vcmp.eq.f32.partialorder %v1596, 8.507059e+37
        %v1598 = vand.u32 %v1586, 2147483648
        %v1599 = vor.u32 1.1754944e-38, %v1598
        %v1600 = vsel %vm1597, %v1599, %v1595
        %v1601 = vmul.f32 %v1576, %v1600
        %v1602 = vmin.f32 %v1601, 1.0
        %v1603 = vmax.f32 %v1602, -1.0
        %v1604 = vmul.f32 %v269, %v269
        %v1605 = vmin.f32 16.0, %v1604
        %v1606 = vmul.f32 %v1605, 2.1237322e-06
        %v1607 = vadd.f32 %v1606, 0.00028619796
        %v1608 = vmul.f32 %v1605, %v1607
        %v1609 = vadd.f32 %v1608, 0.0036580483
        %v1610 = vmul.f32 %v1605, %v1609
        %v1611 = vadd.f32 %v1610, 0.05243302
        %v1612 = vmul.f32 %v1605, %v1611
        %v1613 = vadd.f32 %v1612, 0.18741608
        %v1614 = vmul.f32 %v1605, %v1613
        %v1615 = vadd.f32 %v1614, 1.1283791
        %v1616 = vmul.f32 %v269, %v1615
        %v1617 = vmul.f32 %v1605, 3.8918573e-05
        %v1618 = vadd.f32 %v1617, 0.001143296
        %v1619 = vmul.f32 %v1605, %v1618
        %v1620 = vadd.f32 %v1619, 0.014752088
        %v1621 = vmul.f32 %v1605, %v1620
        %v1622 = vadd.f32 %v1621, 0.112945676
        %v1623 = vmul.f32 %v1605, %v1622
        %v1624 = vadd.f32 %v1623, 0.4994258
        %v1625 = vmul.f32 %v1605, %v1624
        %v1626 = vadd.f32 %v1625, 1.0
        %v1627 = vrcp.pop %v1626
        %v1628 = vmul.f32 %v1626, %v1627
        %v1629 = vsub.f32 1.0, %v1628
        %v1630 = vmul.f32 %v1627, %v1629
        %v1631 = vadd.f32 %v1627, %v1630
        %vm1632 = vweird.f32 %v1626
        %vm1633 = vweird.f32 %v1627
        %vm1634 = vmor %vm1632, %vm1633
        %v1635 = vsel %vm1634, %v1627, %v1631
        %v1636 = vand.u32 2147483647, %v1626
        %vm1637 = vcmp.eq.f32.partialorder %v1636, 8.507059e+37
        %v1638 = vand.u32 %v1626, 2147483648
        %v1639 = vor.u32 1.1754944e-38, %v1638
        %v1640 = vsel %vm1637, %v1639, %v1635
        %v1641 = vmul.f32 %v1616, %v1640
        %v1642 = vmin.f32 %v1641, 1.0
        %v1643 = vmax.f32 %v1642, -1.0
        %v1644 = vmul.f32 %v270, %v270
        %v1645 = vmin.f32 16.0, %v1644
        %v1646 = vmul.f32 %v1645, 2.1237322e-06
        %v1647 = vadd.f32 %v1646, 0.00028619796
        %v1648 = vmul.f32 %v1645, %v1647
        %v1649 = vadd.f32 %v1648, 0.0036580483
        %v1650 = vmul.f32 %v1645, %v1649
        %v1651 = vadd.f32 %v1650, 0.05243302
        %v1652 = vmul.f32 %v1645, %v1651
        %v1653 = vadd.f32 %v1652, 0.18741608
        %v1654 = vmul.f32 %v1645, %v1653
        %v1655 = vadd.f32 %v1654, 1.1283791
        %v1656 = vmul.f32 %v270, %v1655
        %v1657 = vmul.f32 %v1645, 3.8918573e-05
        %v1658 = vadd.f32 %v1657, 0.001143296
        %v1659 = vmul.f32 %v1645, %v1658
        %v1660 = vadd.f32 %v1659, 0.014752088
        %v1661 = vmul.f32 %v1645, %v1660
        %v1662 = vadd.f32 %v1661, 0.112945676
        %v1663 = vmul.f32 %v1645, %v1662
        %v1664 = vadd.f32 %v1663, 0.4994258
        %v1665 = vmul.f32 %v1645, %v1664
        %v1666 = vadd.f32 %v1665, 1.0
        %v1667 = vrcp.pop %v1666
        %v1668 = vmul.f32 %v1666, %v1667
        %v1669 = vsub.f32 1.0, %v1668
        %v1670 = vmul.f32 %v1667, %v1669
        %v1671 = vadd.f32 %v1667, %v1670
        %vm1672 = vweird.f32 %v1666
        %vm1673 = vweird.f32 %v1667
        %vm1674 = vmor %vm1672, %vm1673
        %v1675 = vsel %vm1674, %v1667, %v1671
        %v1676 = vand.u32 2147483647, %v1666
        %vm1677 = vcmp.eq.f32.partialorder %v1676, 8.507059e+37
        %v1678 = vand.u32 %v1666, 2147483648
        %v1679 = vor.u32 1.1754944e-38, %v1678
        %v1680 = vsel %vm1677, %v1679, %v1675
        %v1681 = vmul.f32 %v1656, %v1680
        %v1682 = vmin.f32 %v1681, 1.0
        %v1683 = vmax.f32 %v1682, -1.0
        %v1684 = vmul.f32 %v271, %v271
        %v1685 = vmin.f32 16.0, %v1684
        %v1686 = vmul.f32 %v1685, 2.1237322e-06
        %v1687 = vadd.f32 %v1686, 0.00028619796
        %v1688 = vmul.f32 %v1685, %v1687
        %v1689 = vadd.f32 %v1688, 0.0036580483
        %v1690 = vmul.f32 %v1685, %v1689
        %v1691 = vadd.f32 %v1690, 0.05243302
        %v1692 = vmul.f32 %v1685, %v1691
        %v1693 = vadd.f32 %v1692, 0.18741608
        %v1694 = vmul.f32 %v1685, %v1693
        %v1695 = vadd.f32 %v1694, 1.1283791
        %v1696 = vmul.f32 %v271, %v1695
        %v1697 = vmul.f32 %v1685, 3.8918573e-05
        %v1698 = vadd.f32 %v1697, 0.001143296
        %v1699 = vmul.f32 %v1685, %v1698
        %v1700 = vadd.f32 %v1699, 0.014752088
        %v1701 = vmul.f32 %v1685, %v1700
        %v1702 = vadd.f32 %v1701, 0.112945676
        %v1703 = vmul.f32 %v1685, %v1702
        %v1704 = vadd.f32 %v1703, 0.4994258
        %v1705 = vmul.f32 %v1685, %v1704
        %v1706 = vadd.f32 %v1705, 1.0
        %v1707 = vrcp.pop %v1706
        %v1708 = vmul.f32 %v1706, %v1707
        %v1709 = vsub.f32 1.0, %v1708
        %v1710 = vmul.f32 %v1707, %v1709
        %v1711 = vadd.f32 %v1707, %v1710
        %vm1712 = vweird.f32 %v1706
        %vm1713 = vweird.f32 %v1707
        %vm1714 = vmor %vm1712, %vm1713
        %v1715 = vsel %vm1714, %v1707, %v1711
        %v1716 = vand.u32 2147483647, %v1706
        %vm1717 = vcmp.eq.f32.partialorder %v1716, 8.507059e+37
        %v1718 = vand.u32 %v1706, 2147483648
        %v1719 = vor.u32 1.1754944e-38, %v1718
        %v1720 = vsel %vm1717, %v1719, %v1715
        %v1721 = vmul.f32 %v1696, %v1720
        %v1722 = vmin.f32 %v1721, 1.0
        %v1723 = vmax.f32 %v1722, -1.0
        %v1724 = vmul.f32 %v272, %v272
        %v1725 = vmin.f32 16.0, %v1724
        %v1726 = vmul.f32 %v1725, 2.1237322e-06
        %v1727 = vadd.f32 %v1726, 0.00028619796
        %v1728 = vmul.f32 %v1725, %v1727
        %v1729 = vadd.f32 %v1728, 0.0036580483
        %v1730 = vmul.f32 %v1725, %v1729
        %v1731 = vadd.f32 %v1730, 0.05243302
        %v1732 = vmul.f32 %v1725, %v1731
        %v1733 = vadd.f32 %v1732, 0.18741608
        %v1734 = vmul.f32 %v1725, %v1733
        %v1735 = vadd.f32 %v1734, 1.1283791
        %v1736 = vmul.f32 %v272, %v1735
        %v1737 = vmul.f32 %v1725, 3.8918573e-05
        %v1738 = vadd.f32 %v1737, 0.001143296
        %v1739 = vmul.f32 %v1725, %v1738
        %v1740 = vadd.f32 %v1739, 0.014752088
        %v1741 = vmul.f32 %v1725, %v1740
        %v1742 = vadd.f32 %v1741, 0.112945676
        %v1743 = vmul.f32 %v1725, %v1742
        %v1744 = vadd.f32 %v1743, 0.4994258
        %v1745 = vmul.f32 %v1725, %v1744
        %v1746 = vadd.f32 %v1745, 1.0
        %v1747 = vrcp.pop %v1746
        %v1748 = vmul.f32 %v1746, %v1747
        %v1749 = vsub.f32 1.0, %v1748
        %v1750 = vmul.f32 %v1747, %v1749
        %v1751 = vadd.f32 %v1747, %v1750
        %vm1752 = vweird.f32 %v1746
        %vm1753 = vweird.f32 %v1747
        %vm1754 = vmor %vm1752, %vm1753
        %v1755 = vsel %vm1754, %v1747, %v1751
        %v1756 = vand.u32 2147483647, %v1746
        %vm1757 = vcmp.eq.f32.partialorder %v1756, 8.507059e+37
        %v1758 = vand.u32 %v1746, 2147483648
        %v1759 = vor.u32 1.1754944e-38, %v1758
        %v1760 = vsel %vm1757, %v1759, %v1755
        %v1761 = vmul.f32 %v1736, %v1760
        %v1762 = vmin.f32 %v1761, 1.0
        %v1763 = vmax.f32 %v1762, -1.0
        %v1764 = vmul.f32 %v273, %v273
        %v1765 = vmin.f32 16.0, %v1764
        %v1766 = vmul.f32 %v1765, 2.1237322e-06
        %v1767 = vadd.f32 %v1766, 0.00028619796
        %v1768 = vmul.f32 %v1765, %v1767
        %v1769 = vadd.f32 %v1768, 0.0036580483
        %v1770 = vmul.f32 %v1765, %v1769
        %v1771 = vadd.f32 %v1770, 0.05243302
        %v1772 = vmul.f32 %v1765, %v1771
        %v1773 = vadd.f32 %v1772, 0.18741608
        %v1774 = vmul.f32 %v1765, %v1773
        %v1775 = vadd.f32 %v1774, 1.1283791
        %v1776 = vmul.f32 %v273, %v1775
        %v1777 = vmul.f32 %v1765, 3.8918573e-05
        %v1778 = vadd.f32 %v1777, 0.001143296
        %v1779 = vmul.f32 %v1765, %v1778
        %v1780 = vadd.f32 %v1779, 0.014752088
        %v1781 = vmul.f32 %v1765, %v1780
        %v1782 = vadd.f32 %v1781, 0.112945676
        %v1783 = vmul.f32 %v1765, %v1782
        %v1784 = vadd.f32 %v1783, 0.4994258
        %v1785 = vmul.f32 %v1765, %v1784
        %v1786 = vadd.f32 %v1785, 1.0
        %v1787 = vrcp.pop %v1786
        %v1788 = vmul.f32 %v1786, %v1787
        %v1789 = vsub.f32 1.0, %v1788
        %v1790 = vmul.f32 %v1787, %v1789
        %v1791 = vadd.f32 %v1787, %v1790
        %vm1792 = vweird.f32 %v1786
        %vm1793 = vweird.f32 %v1787
        %vm1794 = vmor %vm1792, %vm1793
        %v1795 = vsel %vm1794, %v1787, %v1791
        %v1796 = vand.u32 2147483647, %v1786
        %vm1797 = vcmp.eq.f32.partialorder %v1796, 8.507059e+37
        %v1798 = vand.u32 %v1786, 2147483648
        %v1799 = vor.u32 1.1754944e-38, %v1798
        %v1800 = vsel %vm1797, %v1799, %v1795
        %v1801 = vmul.f32 %v1776, %v1800
        %v1802 = vmin.f32 %v1801, 1.0
        %v1803 = vmax.f32 %v1802, -1.0
        %v1804 = vmul.f32 %v274, %v274
        %v1805 = vmin.f32 16.0, %v1804
        %v1806 = vmul.f32 %v1805, 2.1237322e-06
        %v1807 = vadd.f32 %v1806, 0.00028619796
        %v1808 = vmul.f32 %v1805, %v1807
        %v1809 = vadd.f32 %v1808, 0.0036580483
        %v1810 = vmul.f32 %v1805, %v1809
        %v1811 = vadd.f32 %v1810, 0.05243302
        %v1812 = vmul.f32 %v1805, %v1811
        %v1813 = vadd.f32 %v1812, 0.18741608
        %v1814 = vmul.f32 %v1805, %v1813
        %v1815 = vadd.f32 %v1814, 1.1283791
        %v1816 = vmul.f32 %v274, %v1815
        %v1817 = vmul.f32 %v1805, 3.8918573e-05
        %v1818 = vadd.f32 %v1817, 0.001143296
        %v1819 = vmul.f32 %v1805, %v1818
        %v1820 = vadd.f32 %v1819, 0.014752088
        %v1821 = vmul.f32 %v1805, %v1820
        %v1822 = vadd.f32 %v1821, 0.112945676
        %v1823 = vmul.f32 %v1805, %v1822
        %v1824 = vadd.f32 %v1823, 0.4994258
        %v1825 = vmul.f32 %v1805, %v1824
        %v1826 = vadd.f32 %v1825, 1.0
        %v1827 = vrcp.pop %v1826
        %v1828 = vmul.f32 %v1826, %v1827
        %v1829 = vsub.f32 1.0, %v1828
        %v1830 = vmul.f32 %v1827, %v1829
        %v1831 = vadd.f32 %v1827, %v1830
        %vm1832 = vweird.f32 %v1826
        %vm1833 = vweird.f32 %v1827
        %vm1834 = vmor %vm1832, %vm1833
        %v1835 = vsel %vm1834, %v1827, %v1831
        %v1836 = vand.u32 2147483647, %v1826
        %vm1837 = vcmp.eq.f32.partialorder %v1836, 8.507059e+37
        %v1838 = vand.u32 %v1826, 2147483648
        %v1839 = vor.u32 1.1754944e-38, %v1838
        %v1840 = vsel %vm1837, %v1839, %v1835
        %v1841 = vmul.f32 %v1816, %v1840
        %v1842 = vmin.f32 %v1841, 1.0
        %v1843 = vmax.f32 %v1842, -1.0
        %v1844 = vmul.f32 %v275, %v275
        %v1845 = vmin.f32 16.0, %v1844
        %v1846 = vmul.f32 %v1845, 2.1237322e-06
        %v1847 = vadd.f32 %v1846, 0.00028619796
        %v1848 = vmul.f32 %v1845, %v1847
        %v1849 = vadd.f32 %v1848, 0.0036580483
        %v1850 = vmul.f32 %v1845, %v1849
        %v1851 = vadd.f32 %v1850, 0.05243302
        %v1852 = vmul.f32 %v1845, %v1851
        %v1853 = vadd.f32 %v1852, 0.18741608
        %v1854 = vmul.f32 %v1845, %v1853
        %v1855 = vadd.f32 %v1854, 1.1283791
        %v1856 = vmul.f32 %v275, %v1855
        %v1857 = vmul.f32 %v1845, 3.8918573e-05
        %v1858 = vadd.f32 %v1857, 0.001143296
        %v1859 = vmul.f32 %v1845, %v1858
        %v1860 = vadd.f32 %v1859, 0.014752088
        %v1861 = vmul.f32 %v1845, %v1860
        %v1862 = vadd.f32 %v1861, 0.112945676
        %v1863 = vmul.f32 %v1845, %v1862
        %v1864 = vadd.f32 %v1863, 0.4994258
        %v1865 = vmul.f32 %v1845, %v1864
        %v1866 = vadd.f32 %v1865, 1.0
        %v1867 = vrcp.pop %v1866
        %v1868 = vmul.f32 %v1866, %v1867
        %v1869 = vsub.f32 1.0, %v1868
        %v1870 = vmul.f32 %v1867, %v1869
        %v1871 = vadd.f32 %v1867, %v1870
        %vm1872 = vweird.f32 %v1866
        %vm1873 = vweird.f32 %v1867
        %vm1874 = vmor %vm1872, %vm1873
        %v1875 = vsel %vm1874, %v1867, %v1871
        %v1876 = vand.u32 2147483647, %v1866
        %vm1877 = vcmp.eq.f32.partialorder %v1876, 8.507059e+37
        %v1878 = vand.u32 %v1866, 2147483648
        %v1879 = vor.u32 1.1754944e-38, %v1878
        %v1880 = vsel %vm1877, %v1879, %v1875
        %v1881 = vmul.f32 %v1856, %v1880
        %v1882 = vmin.f32 %v1881, 1.0
        %v1883 = vmax.f32 %v1882, -1.0
        %v1884 = vmul.f32 %v276, %v276
        %v1885 = vmin.f32 16.0, %v1884
        %v1886 = vmul.f32 %v1885, 2.1237322e-06
        %v1887 = vadd.f32 %v1886, 0.00028619796
        %v1888 = vmul.f32 %v1885, %v1887
        %v1889 = vadd.f32 %v1888, 0.0036580483
        %v1890 = vmul.f32 %v1885, %v1889
        %v1891 = vadd.f32 %v1890, 0.05243302
        %v1892 = vmul.f32 %v1885, %v1891
        %v1893 = vadd.f32 %v1892, 0.18741608
        %v1894 = vmul.f32 %v1885, %v1893
        %v1895 = vadd.f32 %v1894, 1.1283791
        %v1896 = vmul.f32 %v276, %v1895
        %v1897 = vmul.f32 %v1885, 3.8918573e-05
        %v1898 = vadd.f32 %v1897, 0.001143296
        %v1899 = vmul.f32 %v1885, %v1898
        %v1900 = vadd.f32 %v1899, 0.014752088
        %v1901 = vmul.f32 %v1885, %v1900
        %v1902 = vadd.f32 %v1901, 0.112945676
        %v1903 = vmul.f32 %v1885, %v1902
        %v1904 = vadd.f32 %v1903, 0.4994258
        %v1905 = vmul.f32 %v1885, %v1904
        %v1906 = vadd.f32 %v1905, 1.0
        %v1907 = vrcp.pop %v1906
        %v1908 = vmul.f32 %v1906, %v1907
        %v1909 = vsub.f32 1.0, %v1908
        %v1910 = vmul.f32 %v1907, %v1909
        %v1911 = vadd.f32 %v1907, %v1910
        %vm1912 = vweird.f32 %v1906
        %vm1913 = vweird.f32 %v1907
        %vm1914 = vmor %vm1912, %vm1913
        %v1915 = vsel %vm1914, %v1907, %v1911
        %v1916 = vand.u32 2147483647, %v1906
        %vm1917 = vcmp.eq.f32.partialorder %v1916, 8.507059e+37
        %v1918 = vand.u32 %v1906, 2147483648
        %v1919 = vor.u32 1.1754944e-38, %v1918
        %v1920 = vsel %vm1917, %v1919, %v1915
        %v1921 = vmul.f32 %v1896, %v1920
        %v1922 = vmin.f32 %v1921, 1.0
        %v1923 = vmax.f32 %v1922, -1.0
        %v1924 = vmul.f32 %v277, %v277
        %v1925 = vmin.f32 16.0, %v1924
        %v1926 = vmul.f32 %v1925, 2.1237322e-06
        %v1927 = vadd.f32 %v1926, 0.00028619796
        %v1928 = vmul.f32 %v1925, %v1927
        %v1929 = vadd.f32 %v1928, 0.0036580483
        %v1930 = vmul.f32 %v1925, %v1929
        %v1931 = vadd.f32 %v1930, 0.05243302
        %v1932 = vmul.f32 %v1925, %v1931
        %v1933 = vadd.f32 %v1932, 0.18741608
        %v1934 = vmul.f32 %v1925, %v1933
        %v1935 = vadd.f32 %v1934, 1.1283791
        %v1936 = vmul.f32 %v277, %v1935
        %v1937 = vmul.f32 %v1925, 3.8918573e-05
        %v1938 = vadd.f32 %v1937, 0.001143296
        %v1939 = vmul.f32 %v1925, %v1938
        %v1940 = vadd.f32 %v1939, 0.014752088
        %v1941 = vmul.f32 %v1925, %v1940
        %v1942 = vadd.f32 %v1941, 0.112945676
        %v1943 = vmul.f32 %v1925, %v1942
        %v1944 = vadd.f32 %v1943, 0.4994258
        %v1945 = vmul.f32 %v1925, %v1944
        %v1946 = vadd.f32 %v1945, 1.0
        %v1947 = vrcp.pop %v1946
        %v1948 = vmul.f32 %v1946, %v1947
        %v1949 = vsub.f32 1.0, %v1948
        %v1950 = vmul.f32 %v1947, %v1949
        %v1951 = vadd.f32 %v1947, %v1950
        %vm1952 = vweird.f32 %v1946
        %vm1953 = vweird.f32 %v1947
        %vm1954 = vmor %vm1952, %vm1953
        %v1955 = vsel %vm1954, %v1947, %v1951
        %v1956 = vand.u32 2147483647, %v1946
        %vm1957 = vcmp.eq.f32.partialorder %v1956, 8.507059e+37
        %v1958 = vand.u32 %v1946, 2147483648
        %v1959 = vor.u32 1.1754944e-38, %v1958
        %v1960 = vsel %vm1957, %v1959, %v1955
        %v1961 = vmul.f32 %v1936, %v1960
        %v1962 = vmin.f32 %v1961, 1.0
        %v1963 = vmax.f32 %v1962, -1.0
        %v1964 = vmul.f32 %v278, %v278
        %v1965 = vmin.f32 16.0, %v1964
        %v1966 = vmul.f32 %v1965, 2.1237322e-06
        %v1967 = vadd.f32 %v1966, 0.00028619796
        %v1968 = vmul.f32 %v1965, %v1967
        %v1969 = vadd.f32 %v1968, 0.0036580483
        %v1970 = vmul.f32 %v1965, %v1969
        %v1971 = vadd.f32 %v1970, 0.05243302
        %v1972 = vmul.f32 %v1965, %v1971
        %v1973 = vadd.f32 %v1972, 0.18741608
        %v1974 = vmul.f32 %v1965, %v1973
        %v1975 = vadd.f32 %v1974, 1.1283791
        %v1976 = vmul.f32 %v278, %v1975
        %v1977 = vmul.f32 %v1965, 3.8918573e-05
        %v1978 = vadd.f32 %v1977, 0.001143296
        %v1979 = vmul.f32 %v1965, %v1978
        %v1980 = vadd.f32 %v1979, 0.014752088
        %v1981 = vmul.f32 %v1965, %v1980
        %v1982 = vadd.f32 %v1981, 0.112945676
        %v1983 = vmul.f32 %v1965, %v1982
        %v1984 = vadd.f32 %v1983, 0.4994258
        %v1985 = vmul.f32 %v1965, %v1984
        %v1986 = vadd.f32 %v1985, 1.0
        %v1987 = vrcp.pop %v1986
        %v1988 = vmul.f32 %v1986, %v1987
        %v1989 = vsub.f32 1.0, %v1988
        %v1990 = vmul.f32 %v1987, %v1989
        %v1991 = vadd.f32 %v1987, %v1990
        %vm1992 = vweird.f32 %v1986
        %vm1993 = vweird.f32 %v1987
        %vm1994 = vmor %vm1992, %vm1993
        %v1995 = vsel %vm1994, %v1987, %v1991
        %v1996 = vand.u32 2147483647, %v1986
        %vm1997 = vcmp.eq.f32.partialorder %v1996, 8.507059e+37
        %v1998 = vand.u32 %v1986, 2147483648
        %v1999 = vor.u32 1.1754944e-38, %v1998
        %v2000 = vsel %vm1997, %v1999, %v1995
        %v2001 = vmul.f32 %v1976, %v2000
        %v2002 = vmin.f32 %v2001, 1.0
        %v2003 = vmax.f32 %v2002, -1.0
        %v2004 = vmul.f32 %v279, %v279
        %v2005 = vmin.f32 16.0, %v2004
        %v2006 = vmul.f32 %v2005, 2.1237322e-06
        %v2007 = vadd.f32 %v2006, 0.00028619796
        %v2008 = vmul.f32 %v2005, %v2007
        %v2009 = vadd.f32 %v2008, 0.0036580483
        %v2010 = vmul.f32 %v2005, %v2009
        %v2011 = vadd.f32 %v2010, 0.05243302
        %v2012 = vmul.f32 %v2005, %v2011
        %v2013 = vadd.f32 %v2012, 0.18741608
        %v2014 = vmul.f32 %v2005, %v2013
        %v2015 = vadd.f32 %v2014, 1.1283791
        %v2016 = vmul.f32 %v279, %v2015
        %v2017 = vmul.f32 %v2005, 3.8918573e-05
        %v2018 = vadd.f32 %v2017, 0.001143296
        %v2019 = vmul.f32 %v2005, %v2018
        %v2020 = vadd.f32 %v2019, 0.014752088
        %v2021 = vmul.f32 %v2005, %v2020
        %v2022 = vadd.f32 %v2021, 0.112945676
        %v2023 = vmul.f32 %v2005, %v2022
        %v2024 = vadd.f32 %v2023, 0.4994258
        %v2025 = vmul.f32 %v2005, %v2024
        %v2026 = vadd.f32 %v2025, 1.0
        %v2027 = vrcp.pop %v2026
        %v2028 = vmul.f32 %v2026, %v2027
        %v2029 = vsub.f32 1.0, %v2028
        %v2030 = vmul.f32 %v2027, %v2029
        %v2031 = vadd.f32 %v2027, %v2030
        %vm2032 = vweird.f32 %v2026
        %vm2033 = vweird.f32 %v2027
        %vm2034 = vmor %vm2032, %vm2033
        %v2035 = vsel %vm2034, %v2027, %v2031
        %v2036 = vand.u32 2147483647, %v2026
        %vm2037 = vcmp.eq.f32.partialorder %v2036, 8.507059e+37
        %v2038 = vand.u32 %v2026, 2147483648
        %v2039 = vor.u32 1.1754944e-38, %v2038
        %v2040 = vsel %vm2037, %v2039, %v2035
        %v2041 = vmul.f32 %v2016, %v2040
        %v2042 = vmin.f32 %v2041, 1.0
        %v2043 = vmax.f32 %v2042, -1.0
        %v2044 = vmul.f32 %v280, %v280
        %v2045 = vmin.f32 16.0, %v2044
        %v2046 = vmul.f32 %v2045, 2.1237322e-06
        %v2047 = vadd.f32 %v2046, 0.00028619796
        %v2048 = vmul.f32 %v2045, %v2047
        %v2049 = vadd.f32 %v2048, 0.0036580483
        %v2050 = vmul.f32 %v2045, %v2049
        %v2051 = vadd.f32 %v2050, 0.05243302
        %v2052 = vmul.f32 %v2045, %v2051
        %v2053 = vadd.f32 %v2052, 0.18741608
        %v2054 = vmul.f32 %v2045, %v2053
        %v2055 = vadd.f32 %v2054, 1.1283791
        %v2056 = vmul.f32 %v280, %v2055
        %v2057 = vmul.f32 %v2045, 3.8918573e-05
        %v2058 = vadd.f32 %v2057, 0.001143296
        %v2059 = vmul.f32 %v2045, %v2058
        %v2060 = vadd.f32 %v2059, 0.014752088
        %v2061 = vmul.f32 %v2045, %v2060
        %v2062 = vadd.f32 %v2061, 0.112945676
        %v2063 = vmul.f32 %v2045, %v2062
        %v2064 = vadd.f32 %v2063, 0.4994258
        %v2065 = vmul.f32 %v2045, %v2064
        %v2066 = vadd.f32 %v2065, 1.0
        %v2067 = vrcp.pop %v2066
        %v2068 = vmul.f32 %v2066, %v2067
        %v2069 = vsub.f32 1.0, %v2068
        %v2070 = vmul.f32 %v2067, %v2069
        %v2071 = vadd.f32 %v2067, %v2070
        %vm2072 = vweird.f32 %v2066
        %vm2073 = vweird.f32 %v2067
        %vm2074 = vmor %vm2072, %vm2073
        %v2075 = vsel %vm2074, %v2067, %v2071
        %v2076 = vand.u32 2147483647, %v2066
        %vm2077 = vcmp.eq.f32.partialorder %v2076, 8.507059e+37
        %v2078 = vand.u32 %v2066, 2147483648
        %v2079 = vor.u32 1.1754944e-38, %v2078
        %v2080 = vsel %vm2077, %v2079, %v2075
        %v2081 = vmul.f32 %v2056, %v2080
        %v2082 = vmin.f32 %v2081, 1.0
        %v2083 = vmax.f32 %v2082, -1.0
        %v2084 = vmul.f32 %v281, %v281
        %v2085 = vmin.f32 16.0, %v2084
        %v2086 = vmul.f32 %v2085, 2.1237322e-06
        %v2087 = vadd.f32 %v2086, 0.00028619796
        %v2088 = vmul.f32 %v2085, %v2087
        %v2089 = vadd.f32 %v2088, 0.0036580483
        %v2090 = vmul.f32 %v2085, %v2089
        %v2091 = vadd.f32 %v2090, 0.05243302
        %v2092 = vmul.f32 %v2085, %v2091
        %v2093 = vadd.f32 %v2092, 0.18741608
        %v2094 = vmul.f32 %v2085, %v2093
        %v2095 = vadd.f32 %v2094, 1.1283791
        %v2096 = vmul.f32 %v281, %v2095
        %v2097 = vmul.f32 %v2085, 3.8918573e-05
        %v2098 = vadd.f32 %v2097, 0.001143296
        %v2099 = vmul.f32 %v2085, %v2098
        %v2100 = vadd.f32 %v2099, 0.014752088
        %v2101 = vmul.f32 %v2085, %v2100
        %v2102 = vadd.f32 %v2101, 0.112945676
        %v2103 = vmul.f32 %v2085, %v2102
        %v2104 = vadd.f32 %v2103, 0.4994258
        %v2105 = vmul.f32 %v2085, %v2104
        %v2106 = vadd.f32 %v2105, 1.0
        %v2107 = vrcp.pop %v2106
        %v2108 = vmul.f32 %v2106, %v2107
        %v2109 = vsub.f32 1.0, %v2108
        %v2110 = vmul.f32 %v2107, %v2109
        %v2111 = vadd.f32 %v2107, %v2110
        %vm2112 = vweird.f32 %v2106
        %vm2113 = vweird.f32 %v2107
        %vm2114 = vmor %vm2112, %vm2113
        %v2115 = vsel %vm2114, %v2107, %v2111
        %v2116 = vand.u32 2147483647, %v2106
        %vm2117 = vcmp.eq.f32.partialorder %v2116, 8.507059e+37
        %v2118 = vand.u32 %v2106, 2147483648
        %v2119 = vor.u32 1.1754944e-38, %v2118
        %v2120 = vsel %vm2117, %v2119, %v2115
        %v2121 = vmul.f32 %v2096, %v2120
        %v2122 = vmin.f32 %v2121, 1.0
        %v2123 = vmax.f32 %v2122, -1.0
        %v2124 = vmul.f32 %v282, %v282
        %v2125 = vmin.f32 16.0, %v2124
        %v2126 = vmul.f32 %v2125, 2.1237322e-06
        %v2127 = vadd.f32 %v2126, 0.00028619796
        %v2128 = vmul.f32 %v2125, %v2127
        %v2129 = vadd.f32 %v2128, 0.0036580483
        %v2130 = vmul.f32 %v2125, %v2129
        %v2131 = vadd.f32 %v2130, 0.05243302
        %v2132 = vmul.f32 %v2125, %v2131
        %v2133 = vadd.f32 %v2132, 0.18741608
        %v2134 = vmul.f32 %v2125, %v2133
        %v2135 = vadd.f32 %v2134, 1.1283791
        %v2136 = vmul.f32 %v282, %v2135
        %v2137 = vmul.f32 %v2125, 3.8918573e-05
        %v2138 = vadd.f32 %v2137, 0.001143296
        %v2139 = vmul.f32 %v2125, %v2138
        %v2140 = vadd.f32 %v2139, 0.014752088
        %v2141 = vmul.f32 %v2125, %v2140
        %v2142 = vadd.f32 %v2141, 0.112945676
        %v2143 = vmul.f32 %v2125, %v2142
        %v2144 = vadd.f32 %v2143, 0.4994258
        %v2145 = vmul.f32 %v2125, %v2144
        %v2146 = vadd.f32 %v2145, 1.0
        %v2147 = vrcp.pop %v2146
        %v2148 = vmul.f32 %v2146, %v2147
        %v2149 = vsub.f32 1.0, %v2148
        %v2150 = vmul.f32 %v2147, %v2149
        %v2151 = vadd.f32 %v2147, %v2150
        %vm2152 = vweird.f32 %v2146
        %vm2153 = vweird.f32 %v2147
        %vm2154 = vmor %vm2152, %vm2153
        %v2155 = vsel %vm2154, %v2147, %v2151
        %v2156 = vand.u32 2147483647, %v2146
        %vm2157 = vcmp.eq.f32.partialorder %v2156, 8.507059e+37
        %v2158 = vand.u32 %v2146, 2147483648
        %v2159 = vor.u32 1.1754944e-38, %v2158
        %v2160 = vsel %vm2157, %v2159, %v2155
        %v2161 = vmul.f32 %v2136, %v2160
        %v2162 = vmin.f32 %v2161, 1.0
        %v2163 = vmax.f32 %v2162, -1.0
        %v2164 = vmul.f32 %v283, %v283
        %v2165 = vmin.f32 16.0, %v2164
        %v2166 = vmul.f32 %v2165, 2.1237322e-06
        %v2167 = vadd.f32 %v2166, 0.00028619796
        %v2168 = vmul.f32 %v2165, %v2167
        %v2169 = vadd.f32 %v2168, 0.0036580483
        %v2170 = vmul.f32 %v2165, %v2169
        %v2171 = vadd.f32 %v2170, 0.05243302
        %v2172 = vmul.f32 %v2165, %v2171
        %v2173 = vadd.f32 %v2172, 0.18741608
        %v2174 = vmul.f32 %v2165, %v2173
        %v2175 = vadd.f32 %v2174, 1.1283791
        %v2176 = vmul.f32 %v283, %v2175
        %v2177 = vmul.f32 %v2165, 3.8918573e-05
        %v2178 = vadd.f32 %v2177, 0.001143296
        %v2179 = vmul.f32 %v2165, %v2178
        %v2180 = vadd.f32 %v2179, 0.014752088
        %v2181 = vmul.f32 %v2165, %v2180
        %v2182 = vadd.f32 %v2181, 0.112945676
        %v2183 = vmul.f32 %v2165, %v2182
        %v2184 = vadd.f32 %v2183, 0.4994258
        %v2185 = vmul.f32 %v2165, %v2184
        %v2186 = vadd.f32 %v2185, 1.0
        %v2187 = vrcp.pop %v2186
        %v2188 = vmul.f32 %v2186, %v2187
        %v2189 = vsub.f32 1.0, %v2188
        %v2190 = vmul.f32 %v2187, %v2189
        %v2191 = vadd.f32 %v2187, %v2190
        %vm2192 = vweird.f32 %v2186
        %vm2193 = vweird.f32 %v2187
        %vm2194 = vmor %vm2192, %vm2193
        %v2195 = vsel %vm2194, %v2187, %v2191
        %v2196 = vand.u32 2147483647, %v2186
        %vm2197 = vcmp.eq.f32.partialorder %v2196, 8.507059e+37
        %v2198 = vand.u32 %v2186, 2147483648
        %v2199 = vor.u32 1.1754944e-38, %v2198
        %v2200 = vsel %vm2197, %v2199, %v2195
        %v2201 = vmul.f32 %v2176, %v2200
        %v2202 = vmin.f32 %v2201, 1.0
        %v2203 = vmax.f32 %v2202, -1.0
        %v2204 = vadd.f32 %v323, 1.0
        %v2205 = vadd.f32 %v363, 1.0
        %v2206 = vadd.f32 %v403, 1.0
        %v2207 = vadd.f32 %v443, 1.0
        %v2208 = vadd.f32 %v483, 1.0
        %v2209 = vadd.f32 %v523, 1.0
        %v2210 = vadd.f32 %v563, 1.0
        %v2211 = vadd.f32 %v603, 1.0
        %v2212 = vadd.f32 %v643, 1.0
        %v2213 = vadd.f32 %v683, 1.0
        %v2214 = vadd.f32 %v723, 1.0
        %v2215 = vadd.f32 %v763, 1.0
        %v2216 = vadd.f32 %v803, 1.0
        %v2217 = vadd.f32 %v843, 1.0
        %v2218 = vadd.f32 %v883, 1.0
        %v2219 = vadd.f32 %v923, 1.0
        %v2220 = vadd.f32 %v963, 1.0
        %v2221 = vadd.f32 %v1003, 1.0
        %v2222 = vadd.f32 %v1043, 1.0
        %v2223 = vadd.f32 %v1083, 1.0
        %v2224 = vadd.f32 %v1123, 1.0
        %v2225 = vadd.f32 %v1163, 1.0
        %v2226 = vadd.f32 %v1203, 1.0
        %v2227 = vadd.f32 %v1243, 1.0
        %v2228 = vadd.f32 %v1283, 1.0
        %v2229 = vadd.f32 %v1323, 1.0
        %v2230 = vadd.f32 %v1363, 1.0
        %v2231 = vadd.f32 %v1403, 1.0
        %v2232 = vadd.f32 %v1443, 1.0
        %v2233 = vadd.f32 %v1483, 1.0
        %v2234 = vadd.f32 %v1523, 1.0
        %v2235 = vadd.f32 %v1563, 1.0
        %v2236 = vadd.f32 %v1603, 1.0
        %v2237 = vadd.f32 %v1643, 1.0
        %v2238 = vadd.f32 %v1683, 1.0
        %v2239 = vadd.f32 %v1723, 1.0
        %v2240 = vadd.f32 %v1763, 1.0
        %v2241 = vadd.f32 %v1803, 1.0
        %v2242 = vadd.f32 %v1843, 1.0
        %v2243 = vadd.f32 %v1883, 1.0
        %v2244 = vadd.f32 %v1923, 1.0
        %v2245 = vadd.f32 %v1963, 1.0
        %v2246 = vadd.f32 %v2003, 1.0
        %v2247 = vadd.f32 %v2043, 1.0
        %v2248 = vadd.f32 %v2083, 1.0
        %v2249 = vadd.f32 %v2123, 1.0
        %v2250 = vadd.f32 %v2163, 1.0
        %v2251 = vadd.f32 %v2203, 1.0
        %v2252 = vmul.f32 %v188, %v2204
        %v2253 = vmul.f32 %v189, %v2205
        %v2254 = vmul.f32 %v190, %v2206
        %v2255 = vmul.f32 %v191, %v2207
        %v2256 = vmul.f32 %v192, %v2208
        %v2257 = vmul.f32 %v193, %v2209
        %v2258 = vmul.f32 %v194, %v2210
        %v2259 = vmul.f32 %v195, %v2211
        %v2260 = vmul.f32 %v196, %v2212
        %v2261 = vmul.f32 %v197, %v2213
        %v2262 = vmul.f32 %v198, %v2214
        %v2263 = vmul.f32 %v199, %v2215
        %v2264 = vmul.f32 %v200, %v2216
        %v2265 = vmul.f32 %v201, %v2217
        %v2266 = vmul.f32 %v202, %v2218
        %v2267 = vmul.f32 %v203, %v2219
        %v2268 = vmul.f32 %v204, %v2220
        %v2269 = vmul.f32 %v205, %v2221
        %v2270 = vmul.f32 %v206, %v2222
        %v2271 = vmul.f32 %v207, %v2223
        %v2272 = vmul.f32 %v208, %v2224
        %v2273 = vmul.f32 %v209, %v2225
        %v2274 = vmul.f32 %v210, %v2226
        %v2275 = vmul.f32 %v211, %v2227
        %v2276 = vmul.f32 %v212, %v2228
        %v2277 = vmul.f32 %v213, %v2229
        %v2278 = vmul.f32 %v214, %v2230
        %v2279 = vmul.f32 %v215, %v2231
        %v2280 = vmul.f32 %v216, %v2232
        %v2281 = vmul.f32 %v217, %v2233
        %v2282 = vmul.f32 %v218, %v2234
        %v2283 = vmul.f32 %v219, %v2235
        %v2284 = vmul.f32 %v220, %v2236
        %v2285 = vmul.f32 %v221, %v2237
        %v2286 = vmul.f32 %v222, %v2238
        %v2287 = vmul.f32 %v223, %v2239
        %v2288 = vmul.f32 %v224, %v2240
        %v2289 = vmul.f32 %v225, %v2241
        %v2290 = vmul.f32 %v226, %v2242
        %v2291 = vmul.f32 %v227, %v2243
        %v2292 = vmul.f32 %v228, %v2244
        %v2293 = vmul.f32 %v229, %v2245
        %v2294 = vmul.f32 %v230, %v2246
        %v2295 = vmul.f32 %v231, %v2247
        %v2296 = vmul.f32 %v232, %v2248
        %v2297 = vmul.f32 %v233, %v2249
        %v2298 = vmul.f32 %v234, %v2250
        %v2299 = vmul.f32 %v235, %v2251
        %2300 = vst [vmem:[%s137] sm:$0xff] %v2252
        %2301 = vst [vmem:[%s137 + $0x8] sm:$0xff] %v2253
        %2302 = vst [vmem:[%s137 + $0x10] sm:$0xff] %v2254
        %2303 = vst [vmem:[%s137 + $0x18] sm:$0xff] %v2255
        %2304 = vst [vmem:[%s137 + $0x20] sm:$0xff] %v2256
        %2305 = vst [vmem:[%s137 + $0x28] sm:$0xff] %v2257
        %2306 = vst [vmem:[%s137 + $0x30] sm:$0xff] %v2258
        %2307 = vst [vmem:[%s137 + $0x38] sm:$0xff] %v2259
        %2308 = vst [vmem:[%s137 + $0x40] sm:$0xff] %v2260
        %2309 = vst [vmem:[%s137 + $0x48] sm:$0xff] %v2261
        %2310 = vst [vmem:[%s137 + $0x50] sm:$0xff] %v2262
        %2311 = vst [vmem:[%s137 + $0x58] sm:$0xff] %v2263
        %2312 = vst [vmem:[%s137 + $0x60] sm:$0xff] %v2264
        %2313 = vst [vmem:[%s137 + $0x68] sm:$0xff] %v2265
        %2314 = vst [vmem:[%s137 + $0x70] sm:$0xff] %v2266
        %2315 = vst [vmem:[%s137 + $0x78] sm:$0xff] %v2267
        %2316 = vst [vmem:[%s137 + $0x80] sm:$0xff] %v2268
        %2317 = vst [vmem:[%s137 + $0x88] sm:$0xff] %v2269
        %2318 = vst [vmem:[%s137 + $0x90] sm:$0xff] %v2270
        %2319 = vst [vmem:[%s137 + $0x98] sm:$0xff] %v2271
        %2320 = vst [vmem:[%s137 + $0xa0] sm:$0xff] %v2272
        %2321 = vst [vmem:[%s137 + $0xa8] sm:$0xff] %v2273
        %2322 = vst [vmem:[%s137 + $0xb0] sm:$0xff] %v2274
        %2323 = vst [vmem:[%s137 + $0xb8] sm:$0xff] %v2275
        %2324 = vst [vmem:[%s137 + $0xc0] sm:$0xff] %v2276
        %2325 = vst [vmem:[%s137 + $0xc8] sm:$0xff] %v2277
        %2326 = vst [vmem:[%s137 + $0xd0] sm:$0xff] %v2278
        %2327 = vst [vmem:[%s137 + $0xd8] sm:$0xff] %v2279
        %2328 = vst [vmem:[%s137 + $0xe0] sm:$0xff] %v2280
        %2329 = vst [vmem:[%s137 + $0xe8] sm:$0xff] %v2281
        %2330 = vst [vmem:[%s137 + $0xf0] sm:$0xff] %v2282
        %2331 = vst [vmem:[%s137 + $0xf8] sm:$0xff] %v2283
        %2332 = vst [vmem:[%s137 + $0x100] sm:$0xff] %v2284
        %2333 = vst [vmem:[%s137 + $0x108] sm:$0xff] %v2285
        %2334 = vst [vmem:[%s137 + $0x110] sm:$0xff] %v2286
        %2335 = vst [vmem:[%s137 + $0x118] sm:$0xff] %v2287
        %2336 = vst [vmem:[%s137 + $0x120] sm:$0xff] %v2288
        %2337 = vst [vmem:[%s137 + $0x128] sm:$0xff] %v2289
        %2338 = vst [vmem:[%s137 + $0x130] sm:$0xff] %v2290
        %2339 = vst [vmem:[%s137 + $0x138] sm:$0xff] %v2291
        %2340 = vst [vmem:[%s137 + $0x140] sm:$0xff] %v2292
        %2341 = vst [vmem:[%s137 + $0x148] sm:$0xff] %v2293
        %2342 = vst [vmem:[%s137 + $0x150] sm:$0xff] %v2294
        %2343 = vst [vmem:[%s137 + $0x158] sm:$0xff] %v2295
        %2344 = vst [vmem:[%s137 + $0x160] sm:$0xff] %v2296
        %2345 = vst [vmem:[%s137 + $0x168] sm:$0xff] %v2297
        %2346 = vst [vmem:[%s137 + $0x170] sm:$0xff] %v2298
        %2347 = vst [vmem:[%s137 + $0x178] sm:$0xff] %v2299
        %s2348 = sand.u32 %s52, 1
        %s2349 = scalar_lea.sflag [#allocation4], %s2348
        %s2350 = sand.u32 %s52, 1
        %s2351 = smul.addr %s2350, 384
        %s2352 = scalar_lea.vmem [#allocation5], %s2351
        // Predicated region
        $region29: #{tpu_custom_call.1} parent=23 // pred_check
          %p2353 = pneg %p62
        $region30: #{tpu_custom_call.1} parent=23 // pred_check_branch
          %2355 = sbr.rel (%p2353) target = $region32
        $region31: #{tpu_custom_call.1} parent=23 // pred_region
          %s2356 = smul.u32 8, %s18
          %2358 = vsyncadd %s2349, 0
          %s2359 = smul.addr %s2356, 6
          %s2360 = smul.addr %s2359, 8
          %s2361 = scalar_lea.hbm %s1, %s2360
          %s2362 = sshll.u32 %s2352, 4
          %s2363 = int_to_ptr.vmem [resolvable:$true] %s2362
          %s2364 = sshll.u32 %s2361, 4
          %s2365 = int_to_ptr.hbm [resolvable:$true] %s2364
          %2370 = dma.vmem_to_hbm [thread:$0]  %s2363, 6144, %s2365, %s2349, 768, 768, 48
        $region32: #{tpu_custom_call.1} parent=23 // pred_fallthru
          _
      $region24: #{tpu_custom_call.1} parent=5 // pred_fallthru
        _
      %p2371 = scmp.le.s32.totalorder 2, %s13
      // Predicated region
      $region33: #{tpu_custom_call.1} parent=5 // pred_check
        %p2372 = pneg %p2371
      $region34: #{tpu_custom_call.1} parent=5 // pred_check_branch
        %2374 = sbr.rel (%p2372) target = $region36
      $region35: #{tpu_custom_call.1} parent=5 // pred_region
        %s2375 = ssub.s32 %s13, 2
        // Predicated region
        $region37: #{tpu_custom_call.1} parent=35 // pred_check
          %p2376 = pneg %p68
        $region38: #{tpu_custom_call.1} parent=35 // pred_check_branch
          %2378 = sbr.rel (%p2376) target = $region40
        $region39: #{tpu_custom_call.1} parent=35 // pred_region
          %s2379 = sand.u32 %s53, 1
          %s2380 = scalar_lea.sflag [#allocation4], %s2379
          %s2381 = sand.u32 %s53, 1
          %s2382 = smul.addr %s2381, 384
          %s2383 = scalar_lea.vmem [#allocation5], %s2382
          %2385 = dma.done %s2380, 6144
        $region40: #{tpu_custom_call.1} parent=35 // pred_fallthru
          _
      $region36: #{tpu_custom_call.1} parent=5 // pred_fallthru
        _
    $region6: #{tpu_custom_call.1} parent=1 // loop_footer
      %s17 = sadd.s32 1, %s13
    $region7: #{tpu_custom_call.1} parent=1 // loop_footer_branch
      %12 = sbr.rel target = $region3
    $region8: #{tpu_custom_call.1} parent=1 // loop_exit
      _
    %2386 = vsyncpa [#allocation3], 1
    %s2387 = scalar_lea.sflag [#allocation3], 1
    %2388 = vsyncpa %s2387, 1
    %2389 = vsyncpa [#allocation4], 1
    %s2390 = scalar_lea.sflag [#allocation4], 1
    %2391 = vsyncpa %s2390, 1

</llo_original>
